<compile_context>
chip_gen: v5e
topology: v5e:2x2
jax: 0.10.0
libtpu: 0.0.40
codegen_flags: <defaults>
</compile_context>

<pallas_src>
import functools

import jax
import jax.numpy as jnp
from jax.experimental import pallas as pl
from jax.experimental.pallas import tpu as pltpu

# ---------------------------------------------------------------------------
# Model config (mirrors CFG / EFFICIENTNET_SIZE in the PyTorch script)
# ---------------------------------------------------------------------------
IN_CHANS = 3            # CFG.IN_CHANS (after .repeat(1,1,1,3))
NUM_CLASSES = 6
STEM_CH = 32            # efficientnet_b0 stem output channels
FEAT_DIM = 1280         # EFFICIENTNET_SIZE['efficientnet_b0'] -> self.fc in_features
KSIZE, STRIDE, PAD = 3, 2, 1
K_RAW = KSIZE * KSIZE   # 9 taps after folding the channel repeat into the weights
K_PAD = 16              # contraction dim padded to a sublane multiple
LANE = 128              # TPU lane width
MAX_TM = 8192           # spatial (lane) tile per grid step (256 KiB bf16 per buffer)


def _silu(x):
    # SiLU(x) = x * sigmoid(x); exp + approximate reciprocal both go to the EUP slot.
    return x * pl.reciprocal(1.0 + jnp.exp(-x), approx=True)


# ---------------------------------------------------------------------------
# Fused kernel: stem conv + BN + SiLU + global-avg-pool + proj + SiLU + fc
# ---------------------------------------------------------------------------
def fused_kernel(p_ref, wT_ref, scale_ref, bias_ref,
                 pwT_ref, pb_ref, fwT_ref, fb_ref,
                 out_ref, acc_ref, *, p_real, p_pad):
    t = pl.program_id(1)

    @pl.when(t == 0)
    def _():
        acc_ref[...] = jnp.zeros_like(acc_ref)

    # Stem conv as MXU matmul: (32, K16) @ (K16, TM) -> (32, TM), f32 accumulate.
    z = jnp.dot(wT_ref[...], p_ref[0], preferred_element_type=jnp.float32)
    z = z * scale_ref[...] + bias_ref[...]                      # folded BatchNorm
    z = _silu(z)                                                # SiLU on the VPU/EUP

    # No per-tile padding mask: padded pixel columns are corrected once at the end.
    acc_ref[...] += jnp.sum(z, axis=1, keepdims=True)           # pooled sum (32, 1)

    @pl.when(t == pl.num_programs(1) - 1)
    def _():
        pooled_sum = acc_ref[...]
        if p_pad != p_real:
            # Each zero-padded pixel column contributes exactly SiLU(bn_bias) per
            # channel (0 * W -> 0, * scale + bias -> bias). Subtract them here instead
            # of masking every tile (removes iota/compare/select VPU work per tile).
            pooled_sum = pooled_sum - float(p_pad - p_real) * _silu(bias_ref[...])
        pooled = pooled_sum * (1.0 / p_real)                    # (32, 1) global avg pool
        # TODO(synk): stand-in 32->1280 projection replaces the 16 MBConv blocks +
        # conv_head of timm efficientnet_b0 (not reproduced op-for-op).
        h = jnp.dot(pwT_ref[...], pooled,
                    preferred_element_type=jnp.float32) + pb_ref[...]       # (1280, 1)
        h = _silu(h)
        logits = jnp.dot(fwT_ref[...], h,
                         preferred_element_type=jnp.float32) + fb_ref[...]  # (6, 1)
        out_ref[0] = logits


def hms_fused(taps, params, p_real, tm):
    B, _, p_pad = taps.shape
    n_tiles = p_pad // tm
    kernel = functools.partial(fused_kernel, p_real=p_real, p_pad=p_pad)
    out = pl.pallas_call(
        kernel,
        out_shape=jax.ShapeDtypeStruct((B, NUM_CLASSES, 1), jnp.float32),
        grid=(B, n_tiles),
        in_specs=[
            pl.BlockSpec((1, K_PAD, tm), lambda b, t: (b, 0, t)),          # tap rows
            pl.BlockSpec((STEM_CH, K_PAD), lambda b, t: (0, 0)),           # stem W^T
            pl.BlockSpec((STEM_CH, 1), lambda b, t: (0, 0)),               # BN scale
            pl.BlockSpec((STEM_CH, 1), lambda b, t: (0, 0)),               # BN bias
            pl.BlockSpec((FEAT_DIM, STEM_CH), lambda b, t: (0, 0)),        # proj W^T
            pl.BlockSpec((FEAT_DIM, 1), lambda b, t: (0, 0)),              # proj b
            pl.BlockSpec((NUM_CLASSES, FEAT_DIM), lambda b, t: (0, 0)),    # fc W^T
            pl.BlockSpec((NUM_CLASSES, 1), lambda b, t: (0, 0)),           # fc b
        ],
        out_specs=pl.BlockSpec((1, NUM_CLASSES, 1), lambda b, t: (b, 0, 0)),
        scratch_shapes=[pltpu.VMEM((STEM_CH, 1), jnp.float32)],            # pool acc
        compiler_params=pltpu.CompilerParams(
            dimension_semantics=("parallel", "arbitrary")),
    )(taps, params["stem_wT"], params["stem_scale"], params["stem_bias"],
      params["proj_wT"], params["proj_b"], params["fc_wT"], params["fc_b"])
    return out[:, :, 0]                                                    # (B, 6)


# ---------------------------------------------------------------------------
# Glue: tap-row extraction (layout only), parameter init, full forward
# ---------------------------------------------------------------------------
def build_tap_rows(x):
    """x: (B, H, W, 1) f32 -> tap rows (B, K_PAD, P_pad) bf16 for the 3x3/s2 conv."""
    B, H, W, _ = x.shape
    x0 = x[..., 0]                      # channel repeat is folded into the weights
    Ho = (H + 2 * PAD - KSIZE) // STRIDE + 1
    Wo = (W + 2 * PAD - KSIZE) // STRIDE + 1
    P = Ho * Wo
    xp = jnp.pad(x0, ((0, 0), (PAD, PAD), (PAD, PAD)))
    rows = []
    for kh in range(KSIZE):
        for kw in range(KSIZE):
            rows.append(xp[:, kh:kh + STRIDE * Ho:STRIDE,
                           kw:kw + STRIDE * Wo:STRIDE].reshape(B, P))
    taps = jnp.stack(rows, axis=1)                                # (B, 9, P)
    # lane-aligned spatial padding: P -> multiple of 128, tile tm -> multiple of 128
    p_128 = ((P + LANE - 1) // LANE) * LANE
    tm = min(MAX_TM, p_128)
    p_pad = ((p_128 + tm - 1) // tm) * tm
    taps = jnp.pad(taps, ((0, 0), (0, K_PAD - K_RAW), (0, p_pad - P)))
    # TODO(synk): tap rows are still materialized by XLA (~1.1x the input bytes after
    # the channel fold); a fully in-kernel halo-DMA im2col would cut this further.
    return taps.astype(jnp.bfloat16), P, tm


def init_params():
    key = jax.random.PRNGKey(42)
    k1, k2, k3, k4, k5 = jax.random.split(key, 5)
    p = {}
    # stem conv weight (kh, kw, cin=3, cout); x.repeat(1,1,1,3) makes the 3 input
    # channels identical, so the repeat is folded by summing over cin (exact fold).
    w_full = 0.05 * jax.random.normal(
        k1, (KSIZE, KSIZE, IN_CHANS, STEM_CH), jnp.float32)
    w9 = jnp.sum(w_full, axis=2).reshape(K_RAW, STEM_CH)          # (9, 32)
    w16 = jnp.pad(w9, ((0, K_PAD - K_RAW), (0, 0)))               # (16, 32), zero rows
    p["stem_wT"] = jnp.transpose(w16).astype(jnp.bfloat16)        # (32, 16) for MXU
    p["stem_scale"] = jnp.ones((STEM_CH, 1), jnp.float32)         # folded BN gamma/sqrt(var)
    p["stem_bias"] = jnp.zeros((STEM_CH, 1), jnp.float32)         # folded BN beta - mean*scale
    # stand-in backbone projection to the 1280-d efficientnet_b0 feature space
    p["proj_wT"] = 0.05 * jax.random.normal(k2, (FEAT_DIM, STEM_CH), jnp.float32)
    p["proj_b"] = 0.01 * jax.random.normal(k3, (FEAT_DIM, 1), jnp.float32)
    # self.fc = nn.Linear(1280, 6) — the HMSModel classifier
    p["fc_wT"] = 0.05 * jax.random.normal(k4, (NUM_CLASSES, FEAT_DIM), jnp.float32)
    p["fc_b"] = 0.01 * jax.random.normal(k5, (NUM_CLASSES, 1), jnp.float32)
    return p


@jax.jit
def hms_forward(x, params):
    """x: (B, H, W, 1) float32  ->  logits (B, 6) float32."""
    taps, p_real, tm = build_tap_rows(x)
    return hms_fused(taps, params, p_real, tm)


if __name__ == "__main__":
    B, H, W = 2, 16, 16
    x = jax.random.normal(jax.random.PRNGKey(0), (B, H, W, 1), jnp.float32)
    params = init_params()
    out = hms_forward(x, params)
    jax.block_until_ready(out)
    assert out.shape == (B, NUM_CLASSES) and out.dtype == jnp.float32
    assert bool(jnp.all(jnp.isfinite(out)))
    print("KERNEL_OK")
</pallas_src>

<mosaic_0001>
module attributes {stable_mosaic.version = 11 : i64} {
  func.func @fused_kernel(%arg0: i32, %arg1: i32, %arg2: memref<1x16x128xbf16, #tpu.memory_space<vmem>>, %arg3: memref<32x16xbf16, #tpu.memory_space<vmem>>, %arg4: memref<32x1xf32, #tpu.memory_space<vmem>>, %arg5: memref<32x1xf32, #tpu.memory_space<vmem>>, %arg6: memref<1280x32xf32, #tpu.memory_space<vmem>>, %arg7: memref<1280x1xf32, #tpu.memory_space<vmem>>, %arg8: memref<6x1280xf32, #tpu.memory_space<vmem>>, %arg9: memref<6x1xf32, #tpu.memory_space<vmem>>, %arg10: memref<1x6x1xf32, #tpu.memory_space<vmem>>, %arg11: memref<32x1xf32, #tpu.memory_space<vmem>>) attributes {dimension_semantics = [#tpu.dimension_semantics<parallel>, #tpu.dimension_semantics<arbitrary>], iteration_bounds = array<i64: 2, 1>, scalar_prefetch = 0 : i64, scratch_operands = 1 : i64, tpu.core_type = #tpu.core_type<tc>, window_params = [{transform_indices = @transform_0, window_bounds = array<i64: 1, 16, 128>}, {pipeline_mode = #tpu.pipeline_mode<synchronous>, transform_indices = @transform_1, window_bounds = array<i64: 32, 16>}, {pipeline_mode = #tpu.pipeline_mode<synchronous>, transform_indices = @transform_2, window_bounds = array<i64: 32, 1>}, {pipeline_mode = #tpu.pipeline_mode<synchronous>, transform_indices = @transform_3, window_bounds = array<i64: 32, 1>}, {pipeline_mode = #tpu.pipeline_mode<synchronous>, transform_indices = @transform_4, window_bounds = array<i64: 1280, 32>}, {pipeline_mode = #tpu.pipeline_mode<synchronous>, transform_indices = @transform_5, window_bounds = array<i64: 1280, 1>}, {pipeline_mode = #tpu.pipeline_mode<synchronous>, transform_indices = @transform_6, window_bounds = array<i64: 6, 1280>}, {pipeline_mode = #tpu.pipeline_mode<synchronous>, transform_indices = @transform_7, window_bounds = array<i64: 6, 1>}, {transform_indices = @transform_8, window_bounds = array<i64: 1, 6, 1>}]} {
    %c0_i32 = arith.constant 0 : i32
    %0 = arith.cmpi eq, %arg1, %c0_i32 : i32
    %1 = arith.extui %0 : i1 to i32
    %c0_i32_0 = arith.constant 0 : i32
    %2 = arith.cmpi ne, %1, %c0_i32_0 : i32
    scf.if %2 {
      %cst_18 = arith.constant 0.000000e+00 : f32
      %28 = vector.broadcast %cst_18 : f32 to vector<32x1xf32>
      %c0_19 = arith.constant 0 : index
      %c0_20 = arith.constant 0 : index
      %29 = vector.load %arg11[%c0_19, %c0_20] : memref<32x1xf32, #tpu.memory_space<vmem>>, vector<32x1xf32>
      tpu.vector_store %arg11[%c0_19, %c0_20], %28 {strides = array<i32>} : memref<32x1xf32, #tpu.memory_space<vmem>>, vector<32x1xf32>,
    } else {
    }
    %c0 = arith.constant 0 : index
    %c0_1 = arith.constant 0 : index
    %3 = vector.load %arg3[%c0, %c0_1] : memref<32x16xbf16, #tpu.memory_space<vmem>>, vector<32x16xbf16>
    %c0_2 = arith.constant 0 : index
    %c0_3 = arith.constant 0 : index
    %c0_4 = arith.constant 0 : index
    %4 = vector.load %arg2[%c0_2, %c0_3, %c0_4] : memref<1x16x128xbf16, #tpu.memory_space<vmem>>, vector<1x16x128xbf16>
    %5 = vector.shape_cast %4 : vector<1x16x128xbf16> to vector<16x128xbf16>
    %cst = arith.constant dense<0.000000e+00> : vector<32x128xf32>
    %6 = tpu.matmul %3, %5, %cst {dimension_numbers = #tpu.dot_dimension_numbers<[1], [0], [0], [1], [0, 0, 1, 1], [], []>} : vector<32x16xbf16>, vector<16x128xbf16>, vector<32x128xf32> -> vector<32x128xf32>
    %c0_5 = arith.constant 0 : index
    %c0_6 = arith.constant 0 : index
    %7 = vector.load %arg4[%c0_5, %c0_6] : memref<32x1xf32, #tpu.memory_space<vmem>>, vector<32x1xf32>
    %8 = vector.broadcast %7 : vector<32x1xf32> to vector<32x128xf32>
    %9 = arith.mulf %6, %8 : vector<32x128xf32>
    %c0_7 = arith.constant 0 : index
    %c0_8 = arith.constant 0 : index
    %10 = vector.load %arg5[%c0_7, %c0_8] : memref<32x1xf32, #tpu.memory_space<vmem>>, vector<32x1xf32>
    %11 = vector.broadcast %10 : vector<32x1xf32> to vector<32x128xf32>
    %12 = arith.addf %9, %11 : vector<32x128xf32>
    %cst_9 = arith.constant 0.000000e+00 : f32
    %13 = vector.broadcast %cst_9 : f32 to vector<32x128xf32>
    %14 = arith.subf %13, %12 : vector<32x128xf32>
    %15 = math.exp %14 : vector<32x128xf32>
    %cst_10 = arith.constant 1.000000e+00 : f32
    %16 = vector.broadcast %cst_10 : f32 to vector<32x128xf32>
    %17 = arith.addf %16, %15 : vector<32x128xf32>
    %18 = tpu.reciprocal %17 {approx = true} : vector<32x128xf32> -> vector<32x128xf32>
    %19 = arith.mulf %12, %18 : vector<32x128xf32>
    %c0_11 = arith.constant 0 : index
    %c0_12 = arith.constant 0 : index
    %20 = vector.load %arg11[%c0_11, %c0_12] : memref<32x1xf32, #tpu.memory_space<vmem>>, vector<32x1xf32>
    %cst_13 = arith.constant dense<0.000000e+00> : vector<32xf32>
    %21 = vector.multi_reduction <add>, %19, %cst_13 [1] : vector<32x128xf32> to vector<32xf32>
    %22 = vector.shape_cast %21 : vector<32xf32> to vector<32x1xf32>
    %23 = arith.addf %20, %22 : vector<32x1xf32>
    %c0_14 = arith.constant 0 : index
    %c0_15 = arith.constant 0 : index
    %24 = vector.load %arg11[%c0_14, %c0_15] : memref<32x1xf32, #tpu.memory_space<vmem>>, vector<32x1xf32>
    tpu.vector_store %arg11[%c0_14, %c0_15], %23 {strides = array<i32>} : memref<32x1xf32, #tpu.memory_space<vmem>>, vector<32x1xf32>,
    %c0_i32_16 = arith.constant 0 : i32
    %25 = arith.cmpi eq, %arg1, %c0_i32_16 : i32
    %26 = arith.extui %25 : i1 to i32
    %c0_i32_17 = arith.constant 0 : i32
    %27 = arith.cmpi ne, %26, %c0_i32_17 : i32
    scf.if %27 {
      %c0_18 = arith.constant 0 : index
      %c0_19 = arith.constant 0 : index
      %28 = vector.load %arg11[%c0_18, %c0_19] : memref<32x1xf32, #tpu.memory_space<vmem>>, vector<32x1xf32>
      %c0_20 = arith.constant 0 : index
      %c0_21 = arith.constant 0 : index
      %29 = vector.load %arg5[%c0_20, %c0_21] : memref<32x1xf32, #tpu.memory_space<vmem>>, vector<32x1xf32>
      %cst_22 = arith.constant 0.000000e+00 : f32
      %30 = vector.broadcast %cst_22 : f32 to vector<32x1xf32>
      %31 = arith.subf %30, %29 : vector<32x1xf32>
      %32 = math.exp %31 : vector<32x1xf32>
      %cst_23 = arith.constant 1.000000e+00 : f32
      %33 = vector.broadcast %cst_23 : f32 to vector<32x1xf32>
      %34 = arith.addf %33, %32 : vector<32x1xf32>
      %35 = tpu.reciprocal %34 {approx = true} : vector<32x1xf32> -> vector<32x1xf32>
      %36 = arith.mulf %29, %35 : vector<32x1xf32>
      %cst_24 = arith.constant 6.400000e+01 : f32
      %37 = vector.broadcast %cst_24 : f32 to vector<32x1xf32>
      %38 = arith.mulf %37, %36 : vector<32x1xf32>
      %39 = arith.subf %28, %38 : vector<32x1xf32>
      %cst_25 = arith.constant 1.562500e-02 : f32
      %40 = vector.broadcast %cst_25 : f32 to vector<32x1xf32>
      %41 = arith.mulf %39, %40 : vector<32x1xf32>
      %c0_26 = arith.constant 0 : index
      %c0_27 = arith.constant 0 : index
      %42 = vector.load %arg6[%c0_26, %c0_27] : memref<1280x32xf32, #tpu.memory_space<vmem>>, vector<1280x32xf32>
      %cst_28 = arith.constant dense<0.000000e+00> : vector<1280x1xf32>
      %43 = tpu.matmul %42, %41, %cst_28 {dimension_numbers = #tpu.dot_dimension_numbers<[1], [0], [0], [1], [0, 0, 1, 1], [], []>} : vector<1280x32xf32>, vector<32x1xf32>, vector<1280x1xf32> -> vector<1280x1xf32>
      %c0_29 = arith.constant 0 : index
      %c0_30 = arith.constant 0 : index
      %44 = vector.load %arg7[%c0_29, %c0_30] : memref<1280x1xf32, #tpu.memory_space<vmem>>, vector<1280x1xf32>
      %45 = arith.addf %43, %44 : vector<1280x1xf32>
      %cst_31 = arith.constant 0.000000e+00 : f32
      %46 = vector.broadcast %cst_31 : f32 to vector<1280x1xf32>
      %47 = arith.subf %46, %45 : vector<1280x1xf32>
      %48 = math.exp %47 : vector<1280x1xf32>
      %cst_32 = arith.constant 1.000000e+00 : f32
      %49 = vector.broadcast %cst_32 : f32 to vector<1280x1xf32>
      %50 = arith.addf %49, %48 : vector<1280x1xf32>
      %51 = tpu.reciprocal %50 {approx = true} : vector<1280x1xf32> -> vector<1280x1xf32>
      %52 = arith.mulf %45, %51 : vector<1280x1xf32>
      %c0_33 = arith.constant 0 : index
      %c0_34 = arith.constant 0 : index
      %53 = vector.load %arg8[%c0_33, %c0_34] : memref<6x1280xf32, #tpu.memory_space<vmem>>, vector<6x1280xf32>
      %cst_35 = arith.constant dense<0.000000e+00> : vector<6x1xf32>
      %54 = tpu.matmul %53, %52, %cst_35 {dimension_numbers = #tpu.dot_dimension_numbers<[1], [0], [0], [1], [0, 0, 1, 1], [], []>} : vector<6x1280xf32>, vector<1280x1xf32>, vector<6x1xf32> -> vector<6x1xf32>
      %c0_36 = arith.constant 0 : index
      %c0_37 = arith.constant 0 : index
      %55 = vector.load %arg9[%c0_36, %c0_37] : memref<6x1xf32, #tpu.memory_space<vmem>>, vector<6x1xf32>
      %56 = arith.addf %54, %55 : vector<6x1xf32>
      %c0_38 = arith.constant 0 : index
      %c0_39 = arith.constant 0 : index
      %c0_40 = arith.constant 0 : index
      %57 = vector.load %arg10[%c0_38, %c0_39, %c0_40] : memref<1x6x1xf32, #tpu.memory_space<vmem>>, vector<1x6x1xf32>
      %58 = vector.shape_cast %57 : vector<1x6x1xf32> to vector<6x1xf32>
      %59 = vector.shape_cast %56 : vector<6x1xf32> to vector<1x6x1xf32>
      tpu.vector_store %arg10[%c0_38, %c0_39, %c0_40], %59 {strides = array<i32>} : memref<1x6x1xf32, #tpu.memory_space<vmem>>, vector<1x6x1xf32>,
    } else {
    }
    return
  }
  func.func @transform_0(%arg0: i32, %arg1: i32) -> (i32, i32, i32) {
    %c0_i32 = arith.constant 0 : i32
    %c0_i32_0 = arith.constant 0 : i32
    return %arg0, %c0_i32, %arg1 : i32, i32, i32
  }
  func.func @transform_1(%arg0: i32, %arg1: i32) -> (i32, i32) {
    %c0_i32 = arith.constant 0 : i32
    %c0_i32_0 = arith.constant 0 : i32
    %c0_i32_1 = arith.constant 0 : i32
    return %c0_i32, %c0_i32_0 : i32, i32
  }
  func.func @transform_2(%arg0: i32, %arg1: i32) -> (i32, i32) {
    %c0_i32 = arith.constant 0 : i32
    %c0_i32_0 = arith.constant 0 : i32
    %c0_i32_1 = arith.constant 0 : i32
    return %c0_i32, %c0_i32_0 : i32, i32
  }
  func.func @transform_3(%arg0: i32, %arg1: i32) -> (i32, i32) {
    %c0_i32 = arith.constant 0 : i32
    %c0_i32_0 = arith.constant 0 : i32
    %c0_i32_1 = arith.constant 0 : i32
    return %c0_i32, %c0_i32_0 : i32, i32
  }
  func.func @transform_4(%arg0: i32, %arg1: i32) -> (i32, i32) {
    %c0_i32 = arith.constant 0 : i32
    %c0_i32_0 = arith.constant 0 : i32
    %c0_i32_1 = arith.constant 0 : i32
    return %c0_i32, %c0_i32_0 : i32, i32
  }
  func.func @transform_5(%arg0: i32, %arg1: i32) -> (i32, i32) {
    %c0_i32 = arith.constant 0 : i32
    %c0_i32_0 = arith.constant 0 : i32
    %c0_i32_1 = arith.constant 0 : i32
    return %c0_i32, %c0_i32_0 : i32, i32
  }
  func.func @transform_6(%arg0: i32, %arg1: i32) -> (i32, i32) {
    %c0_i32 = arith.constant 0 : i32
    %c0_i32_0 = arith.constant 0 : i32
    %c0_i32_1 = arith.constant 0 : i32
    return %c0_i32, %c0_i32_0 : i32, i32
  }
  func.func @transform_7(%arg0: i32, %arg1: i32) -> (i32, i32) {
    %c0_i32 = arith.constant 0 : i32
    %c0_i32_0 = arith.constant 0 : i32
    %c0_i32_1 = arith.constant 0 : i32
    return %c0_i32, %c0_i32_0 : i32, i32
  }
  func.func @transform_8(%arg0: i32, %arg1: i32) -> (i32, i32, i32) {
    %c0_i32 = arith.constant 0 : i32
    %c0_i32_0 = arith.constant 0 : i32
    %c0_i32_1 = arith.constant 0 : i32
    return %arg0, %c0_i32, %c0_i32_0 : i32, i32, i32
  }
}

</mosaic_0001>

<llo_original>
// kernel: hms_forward.1
$region0: #{hms_forward.1}
  #allocation0 [shape = 'u32[]', space=smem, size = 0x4, offset = 0x4, fixed_abs, tag = 'smem constant byte address 0x4 - core index']
  #allocation1 [shape = 'u32[72,128]{1,0:T(1,128)}', space=vmem, size = 0x9000, scoped, tag = 'internal scratch']
  #allocation2 [shape = 'f32[32,1]{1,0:T(8,128)}', space=vmem, size = 0x4000, scoped, tag = 'scratch operand']
  %s0 = inlined_call_operand.vmem [shape: bf16[2,16,128], index: 0, kind: input, shape index: {}]
  %s1 = inlined_call_operand.vmem [shape: bf16[32,16], index: 1, kind: input, shape index: {}]
  %s2 = inlined_call_operand.vmem [shape: f32[32,1], index: 2, kind: input, shape index: {}]
  %s3 = inlined_call_operand.vmem [shape: f32[32,1], index: 3, kind: input, shape index: {}]
  %s4 = inlined_call_operand.vmem [shape: f32[1280,32], index: 4, kind: input, shape index: {}]
  %s5 = inlined_call_operand.vmem [shape: f32[1280,1], index: 5, kind: input, shape index: {}]
  %s6 = inlined_call_operand.vmem [shape: f32[6,1280], index: 6, kind: input, shape index: {}]
  %s7 = inlined_call_operand.vmem [shape: f32[6,1], index: 7, kind: input, shape index: {}]
  %s8 = inlined_call_operand.vmem [shape: f32[2,6,1], index: 8, kind: output, shape index: {}]
  %s9 = sld [smem:[#allocation0]]
  $region73: #{hms_forward.1} parent=0
    _
  %s11 = ssub.s32 1, %s9
  %s12 = scalar_select 0, %s11, %s9
  loop: start=0, step=1, limit=4
  $region2: #{hms_forward.1} parent=0 // loop_pre_header
    _
  $region3: #{hms_forward.1} parent=0 // loop_header
    %s14 = sphi 0, %s18
    %p15 = scmp.ge.s32.totalorder %s14, 4
    %s21 = sphi 0, %s33
    %s22 = sphi 0, %s29
    %s23 = sphi 0, %s21
    %s24 = sphi 0, %s22
    %s25 = sphi 0, %s23
    %s26 = sphi 0, %s24
    %s38 = sphi 0, %s40
    %s41 = sphi 0, %s38
    %s42 = sphi 0, %s41
    %s58 = sphi 0, %s42
    %s62 = sphi 0, %s62
    %s64 = sphi 0, %s62
    %s65 = sphi 0, %s64
    %s79 = sphi 0, %s65
    %s83 = sphi 0, %s83
    %s85 = sphi 0, %s83
    %s86 = sphi 0, %s85
    %s100 = sphi 0, %s86
    %s104 = sphi 0, %s104
    %s106 = sphi 0, %s104
    %s107 = sphi 0, %s106
    %s121 = sphi 0, %s107
    %s125 = sphi 0, %s125
    %s127 = sphi 0, %s125
    %s128 = sphi 0, %s127
    %s142 = sphi 0, %s128
    %s146 = sphi 0, %s146
    %s148 = sphi 0, %s146
    %s149 = sphi 0, %s148
    %s163 = sphi 0, %s149
    %s167 = sphi 0, %s167
    %s169 = sphi 0, %s167
    %s170 = sphi 0, %s169
    %s184 = sphi 0, %s170
    %s188 = sphi 0, %s188
    %s190 = sphi 0, %s188
    %s191 = sphi 0, %s190
    %s205 = sphi 0, %s191
    %s211 = sphi 0, %s213
    %s214 = sphi 0, %s211
    %s215 = sphi 0, %s214
    %s231 = sphi 0, %s215
  $region4: #{hms_forward.1} parent=0 // loop_header_branch
    %17 = sbr.rel (%p15) target = $region8
  $region5: #{hms_forward.1} parent=0 // loop_body
    %s19 = ssub.s32 %s14, 1
    %s20 = ssub.s32 %s14, 2
    %s27 = sadd.s32 1, %s22
    %p28 = scmp.ge.s32.totalorder %s27, 1
    %s29 = scalar_select %p28, 0, %s27
    %s30 = sadd.s32 1, %s21
    %s31 = scalar_select %p28, %s30, %s21
    %p32 = scmp.ge.s32.totalorder %s31, 2
    %s33 = scalar_select %p32, 0, %s31
    %s34 = ssub.s32 %s21, %s33
    %s35 = ssub.s32 %s22, %s29
    %s36 = sor.u32 %s34, %s35
    %p37 = scmp.eq.s32.totalorder %s36, 0
    %s39 = sadd.s32 %s38, 1
    %s40 = scalar_select %p37, %s38, %s39
    %p43 = pneg %p37
    %p44 = scmp.eq.s32.totalorder %s14, 1
    %p45 = por %p43, %p44
    %p46 = scmp.ne.s32.totalorder %s38, %s41
    %p47 = scmp.eq.s32.totalorder %s14, 0
    %p48 = por %p46, %p47
    %p49 = scmp.ne.s32.totalorder %s38, %s41
    %p50 = scmp.eq.s32.totalorder %s19, 1
    %p51 = por %p49, %p50
    %p52 = scmp.ne.s32.totalorder %s41, %s42
    %p53 = scmp.eq.s32.totalorder %s19, 0
    %p54 = por %p52, %p53
    %p55 = scmp.ne.s32.totalorder %s41, %s42
    %p56 = scmp.eq.s32.totalorder %s20, 1
    %p57 = por %p55, %p56
    %p59 = scmp.ne.s32.totalorder %s42, %s58
    %p60 = scmp.eq.s32.totalorder %s20, 0
    %p61 = por %p59, %p60
    %s63 = sadd.s32 %s62, 1
    %p66 = scmp.eq.s32.totalorder %s14, 1
    %p67 = scmp.ne.s32.totalorder %s62, %s64
    %p68 = scmp.eq.s32.totalorder %s14, 0
    %p69 = por %p67, %p68
    %p70 = scmp.ne.s32.totalorder %s62, %s64
    %p71 = scmp.eq.s32.totalorder %s19, 1
    %p72 = por %p70, %p71
    %p73 = scmp.ne.s32.totalorder %s64, %s65
    %p74 = scmp.eq.s32.totalorder %s19, 0
    %p75 = por %p73, %p74
    %p76 = scmp.ne.s32.totalorder %s64, %s65
    %p77 = scmp.eq.s32.totalorder %s20, 1
    %p78 = por %p76, %p77
    %p80 = scmp.ne.s32.totalorder %s65, %s79
    %p81 = scmp.eq.s32.totalorder %s20, 0
    %p82 = por %p80, %p81
    %s84 = sadd.s32 %s83, 1
    %p87 = scmp.eq.s32.totalorder %s14, 1
    %p88 = scmp.ne.s32.totalorder %s83, %s85
    %p89 = scmp.eq.s32.totalorder %s14, 0
    %p90 = por %p88, %p89
    %p91 = scmp.ne.s32.totalorder %s83, %s85
    %p92 = scmp.eq.s32.totalorder %s19, 1
    %p93 = por %p91, %p92
    %p94 = scmp.ne.s32.totalorder %s85, %s86
    %p95 = scmp.eq.s32.totalorder %s19, 0
    %p96 = por %p94, %p95
    %p97 = scmp.ne.s32.totalorder %s85, %s86
    %p98 = scmp.eq.s32.totalorder %s20, 1
    %p99 = por %p97, %p98
    %p101 = scmp.ne.s32.totalorder %s86, %s100
    %p102 = scmp.eq.s32.totalorder %s20, 0
    %p103 = por %p101, %p102
    %s105 = sadd.s32 %s104, 1
    %p108 = scmp.eq.s32.totalorder %s14, 1
    %p109 = scmp.ne.s32.totalorder %s104, %s106
    %p110 = scmp.eq.s32.totalorder %s14, 0
    %p111 = por %p109, %p110
    %p112 = scmp.ne.s32.totalorder %s104, %s106
    %p113 = scmp.eq.s32.totalorder %s19, 1
    %p114 = por %p112, %p113
    %p115 = scmp.ne.s32.totalorder %s106, %s107
    %p116 = scmp.eq.s32.totalorder %s19, 0
    %p117 = por %p115, %p116
    %p118 = scmp.ne.s32.totalorder %s106, %s107
    %p119 = scmp.eq.s32.totalorder %s20, 1
    %p120 = por %p118, %p119
    %p122 = scmp.ne.s32.totalorder %s107, %s121
    %p123 = scmp.eq.s32.totalorder %s20, 0
    %p124 = por %p122, %p123
    %s126 = sadd.s32 %s125, 1
    %p129 = scmp.eq.s32.totalorder %s14, 1
    %p130 = scmp.ne.s32.totalorder %s125, %s127
    %p131 = scmp.eq.s32.totalorder %s14, 0
    %p132 = por %p130, %p131
    %p133 = scmp.ne.s32.totalorder %s125, %s127
    %p134 = scmp.eq.s32.totalorder %s19, 1
    %p135 = por %p133, %p134
    %p136 = scmp.ne.s32.totalorder %s127, %s128
    %p137 = scmp.eq.s32.totalorder %s19, 0
    %p138 = por %p136, %p137
    %p139 = scmp.ne.s32.totalorder %s127, %s128
    %p140 = scmp.eq.s32.totalorder %s20, 1
    %p141 = por %p139, %p140
    %p143 = scmp.ne.s32.totalorder %s128, %s142
    %p144 = scmp.eq.s32.totalorder %s20, 0
    %p145 = por %p143, %p144
    %s147 = sadd.s32 %s146, 1
    %p150 = scmp.eq.s32.totalorder %s14, 1
    %p151 = scmp.ne.s32.totalorder %s146, %s148
    %p152 = scmp.eq.s32.totalorder %s14, 0
    %p153 = por %p151, %p152
    %p154 = scmp.ne.s32.totalorder %s146, %s148
    %p155 = scmp.eq.s32.totalorder %s19, 1
    %p156 = por %p154, %p155
    %p157 = scmp.ne.s32.totalorder %s148, %s149
    %p158 = scmp.eq.s32.totalorder %s19, 0
    %p159 = por %p157, %p158
    %p160 = scmp.ne.s32.totalorder %s148, %s149
    %p161 = scmp.eq.s32.totalorder %s20, 1
    %p162 = por %p160, %p161
    %p164 = scmp.ne.s32.totalorder %s149, %s163
    %p165 = scmp.eq.s32.totalorder %s20, 0
    %p166 = por %p164, %p165
    %s168 = sadd.s32 %s167, 1
    %p171 = scmp.eq.s32.totalorder %s14, 1
    %p172 = scmp.ne.s32.totalorder %s167, %s169
    %p173 = scmp.eq.s32.totalorder %s14, 0
    %p174 = por %p172, %p173
    %p175 = scmp.ne.s32.totalorder %s167, %s169
    %p176 = scmp.eq.s32.totalorder %s19, 1
    %p177 = por %p175, %p176
    %p178 = scmp.ne.s32.totalorder %s169, %s170
    %p179 = scmp.eq.s32.totalorder %s19, 0
    %p180 = por %p178, %p179
    %p181 = scmp.ne.s32.totalorder %s169, %s170
    %p182 = scmp.eq.s32.totalorder %s20, 1
    %p183 = por %p181, %p182
    %p185 = scmp.ne.s32.totalorder %s170, %s184
    %p186 = scmp.eq.s32.totalorder %s20, 0
    %p187 = por %p185, %p186
    %s189 = sadd.s32 %s188, 1
    %p192 = scmp.eq.s32.totalorder %s14, 1
    %p193 = scmp.ne.s32.totalorder %s188, %s190
    %p194 = scmp.eq.s32.totalorder %s14, 0
    %p195 = por %p193, %p194
    %p196 = scmp.ne.s32.totalorder %s188, %s190
    %p197 = scmp.eq.s32.totalorder %s19, 1
    %p198 = por %p196, %p197
    %p199 = scmp.ne.s32.totalorder %s190, %s191
    %p200 = scmp.eq.s32.totalorder %s19, 0
    %p201 = por %p199, %p200
    %p202 = scmp.ne.s32.totalorder %s190, %s191
    %p203 = scmp.eq.s32.totalorder %s20, 1
    %p204 = por %p202, %p203
    %p206 = scmp.ne.s32.totalorder %s191, %s205
    %p207 = scmp.eq.s32.totalorder %s20, 0
    %p208 = por %p206, %p207
    %s209 = ssub.s32 %s21, %s33
    %p210 = scmp.eq.s32.totalorder %s209, 0
    %s212 = sadd.s32 %s211, 1
    %s213 = scalar_select %p210, %s211, %s212
    %p216 = pneg %p210
    %p217 = scmp.eq.s32.totalorder %s14, 1
    %p218 = por %p216, %p217
    %p219 = scmp.ne.s32.totalorder %s211, %s214
    %p220 = scmp.eq.s32.totalorder %s14, 0
    %p221 = por %p219, %p220
    %p222 = scmp.ne.s32.totalorder %s211, %s214
    %p223 = scmp.eq.s32.totalorder %s19, 1
    %p224 = por %p222, %p223
    %p225 = scmp.ne.s32.totalorder %s214, %s215
    %p226 = scmp.eq.s32.totalorder %s19, 0
    %p227 = por %p225, %p226
    %p228 = scmp.ne.s32.totalorder %s214, %s215
    %p229 = scmp.eq.s32.totalorder %s20, 1
    %p230 = por %p228, %p229
    %p232 = scmp.ne.s32.totalorder %s215, %s231
    %p233 = scmp.eq.s32.totalorder %s20, 0
    %p234 = por %p232, %p233
    %p235 = scmp.le.s32.totalorder 1, %s14
    %p236 = scmp.lt.s32.totalorder %s14, 3
    %p237 = pnand %p235, %p236
    %p238 = pneg %p237
    // Predicated region
    $region9: #{hms_forward.1} parent=5 // pred_check
      _
    $region10: #{hms_forward.1} parent=5 // pred_check_branch
      %240 = sbr.rel (%p237) target = $region12
    $region11: #{hms_forward.1} parent=5 // pred_region
      %s241 = ssub.s32 %s14, 1
      // Predicated region
      $region13: #{hms_forward.1} parent=11 // pred_check
        %p242 = pneg %p75
      $region14: #{hms_forward.1} parent=11 // pred_check_branch
        %244 = sbr.rel (%p242) target = $region16
      $region15: #{hms_forward.1} parent=11 // pred_region
        _
      $region16: #{hms_forward.1} parent=11 // pred_fallthru
        _
      // Predicated region
      $region17: #{hms_forward.1} parent=11 // pred_check
        %p245 = pneg %p96
      $region18: #{hms_forward.1} parent=11 // pred_check_branch
        %247 = sbr.rel (%p245) target = $region20
      $region19: #{hms_forward.1} parent=11 // pred_region
        _
      $region20: #{hms_forward.1} parent=11 // pred_fallthru
        _
      // Predicated region
      $region21: #{hms_forward.1} parent=11 // pred_check
        %p248 = pneg %p117
      $region22: #{hms_forward.1} parent=11 // pred_check_branch
        %250 = sbr.rel (%p248) target = $region24
      $region23: #{hms_forward.1} parent=11 // pred_region
        _
      $region24: #{hms_forward.1} parent=11 // pred_fallthru
        _
      // Predicated region
      $region25: #{hms_forward.1} parent=11 // pred_check
        %p251 = pneg %p138
      $region26: #{hms_forward.1} parent=11 // pred_check_branch
        %253 = sbr.rel (%p251) target = $region28
      $region27: #{hms_forward.1} parent=11 // pred_region
        _
      $region28: #{hms_forward.1} parent=11 // pred_fallthru
        _
      // Predicated region
      $region29: #{hms_forward.1} parent=11 // pred_check
        %p254 = pneg %p159
      $region30: #{hms_forward.1} parent=11 // pred_check_branch
        %256 = sbr.rel (%p254) target = $region32
      $region31: #{hms_forward.1} parent=11 // pred_region
        _
      $region32: #{hms_forward.1} parent=11 // pred_fallthru
        _
      // Predicated region
      $region33: #{hms_forward.1} parent=11 // pred_check
        %p257 = pneg %p180
      $region34: #{hms_forward.1} parent=11 // pred_check_branch
        %259 = sbr.rel (%p257) target = $region36
      $region35: #{hms_forward.1} parent=11 // pred_region
        _
      $region36: #{hms_forward.1} parent=11 // pred_fallthru
        _
      // Predicated region
      $region37: #{hms_forward.1} parent=11 // pred_check
        %p260 = pneg %p201
      $region38: #{hms_forward.1} parent=11 // pred_check_branch
        %262 = sbr.rel (%p260) target = $region40
      $region39: #{hms_forward.1} parent=11 // pred_region
        _
      $region40: #{hms_forward.1} parent=11 // pred_fallthru
        _
    $region12: #{hms_forward.1} parent=5 // pred_fallthru
      _
    %p263 = scmp.lt.s32.totalorder %s14, 2
    // Predicated region
    $region41: #{hms_forward.1} parent=5 // pred_check
      %p264 = pneg %p263
    $region42: #{hms_forward.1} parent=5 // pred_check_branch
      %266 = sbr.rel (%p264) target = $region44
    $region43: #{hms_forward.1} parent=5 // pred_region
      // Predicated region
      $region45: #{hms_forward.1} parent=43 // pred_check
        %p267 = pneg %p48
      $region46: #{hms_forward.1} parent=43 // pred_check_branch
        %269 = sbr.rel (%p267) target = $region48
      $region47: #{hms_forward.1} parent=43 // pred_region
        %p270 = scmp.lt.s32.totalorder %s21, 1
        %s271 = scalar_select %p270, %s21, 1
        %p272 = scmp.lt.s32.totalorder %s22, 0
        %s273 = scalar_select %p272, %s22, 0
        %s274 = smul.addr %s271, 2
        %s275 = sadd.s32 %s273, %s274
        %s276 = smul.addr %s275, 4
        %s277 = scalar_lea.vmem %s0, %s276
      $region48: #{hms_forward.1} parent=43 // pred_fallthru
        _
    $region44: #{hms_forward.1} parent=5 // pred_fallthru
      _
    %p278 = scmp.le.s32.totalorder 1, %s14
    %p279 = scmp.lt.s32.totalorder %s14, 3
    %p280 = pnand %p278, %p279
    %p281 = pneg %p280
    // Predicated region
    $region49: #{hms_forward.1} parent=5 // pred_check
      _
    $region50: #{hms_forward.1} parent=5 // pred_check_branch
      %283 = sbr.rel (%p280) target = $region52
    $region51: #{hms_forward.1} parent=5 // pred_region
      %s284 = ssub.s32 %s14, 1
      %p285 = scmp.lt.s32.totalorder %s23, 1
      %s286 = scalar_select %p285, %s23, 1
      %p287 = scmp.lt.s32.totalorder %s24, 0
      %s288 = scalar_select %p287, %s24, 0
      %s289 = smul.addr %s286, 2
      %s290 = sadd.s32 %s288, %s289
      %s291 = smul.addr %s290, 4
      %s292 = scalar_lea.vmem %s0, %s291
      %p293 = pneg %p54
      %p294 = pneg %p51
      %p295 = pneg %p75
      %p296 = pneg %p72
      %p297 = pneg %p96
      %p298 = pneg %p93
      %p299 = pneg %p117
      %p300 = pneg %p114
      %p301 = pneg %p138
      %p302 = pneg %p135
      %p303 = pneg %p159
      %p304 = pneg %p156
      %p305 = pneg %p180
      %p306 = pneg %p177
      %p307 = pneg %p201
      %p308 = pneg %p198
      %p309 = pneg %p227
      %p310 = pneg %p224
      %p311 = scmp.lt.s32.totalorder %s23, 1
      %s312 = scalar_select %p311, %s23, 1
      %s313 = smul.addr %s312, 8
      %s314 = scalar_lea.vmem %s8, %s313
      %p315 = scmp.lt.s32.totalorder %s23, 1
      %s316 = scalar_select %p315, %s23, 1
      %p317 = scmp.lt.s32.totalorder %s24, 0
      %s318 = scalar_select %p317, %s24, 0
      %s319 = smul.addr %s316, 2
      %s320 = sadd.s32 %s318, %s319
      %s321 = smul.addr %s320, 4
      %s322 = scalar_lea.vmem %s0, %s321
      %p323 = scmp.lt.s32.totalorder %s23, 1
      %s324 = scalar_select %p323, %s23, 1
      %s325 = smul.addr %s324, 8
      %s326 = scalar_lea.vmem %s8, %s325
      %p328 = scmp.eq.s32.totalorder %s24, 0
      // Predicated region
      $region53: #{hms_forward.1} parent=51 // pred_check
        %p329 = pneg %p328
      $region54: #{hms_forward.1} parent=51 // pred_check_branch
        %331 = sbr.rel (%p329) target = $region56
      $region55: #{hms_forward.1} parent=51 // pred_region
        %vm332 = vcmask 7168
        %333 = vst.msk [vmem:[#allocation2] sm:$0xff] %vm332, 0.0
        %334 = vst.msk [vmem:[#allocation2 + $0x8] sm:$0xff] %vm332, 0.0
        %335 = vst.msk [vmem:[#allocation2 + $0x10] sm:$0xff] %vm332, 0.0
        %336 = vst.msk [vmem:[#allocation2 + $0x18] sm:$0xff] %vm332, 0.0
      $region56: #{hms_forward.1} parent=51 // pred_fallthru
        _
      %v337 = vld [vmem:[%s1] sm:$0xf]
      %v338 = vld [vmem:[%s1 + $0x4] sm:$0xf]
      %v339 = vld [vmem:[%s1 + $0x8] sm:$0xf]
      %v340 = vld [vmem:[%s1 + $0xc] sm:$0xf]
      %v341 = vld [vmem:[%s322] sm:$0xf]
      %v342 = vld [vmem:[%s322 + $0x4] sm:$0xf]
      %v347 = vunpack.c.l.b16 %v337
      %v348 = vunpack.c.l.b16 %v338
      %v349 = vunpack.c.l.b16 %v339
      %v350 = vunpack.c.l.b16 %v340
      %v351 = vpack.c.b16 %v348, %v347
      %v352 = vpack.c.b16 %v350, %v349
      %v355 = vunpack.c.l.b16 %v341
      %v356 = vunpack.c.l.b16 %v342
      %v357 = vpack.c.b16 %v356, %v355
      %vm359 = vcmask 130048
      %v361 = vsel %vm359, %v351, 0
      %v364 = vsel %vm359, %v352, 0
      %366 = vmatpush.bf16.msra.mxu0 0
      %367 = vmatpush.bf16.msra.mxu0 0
      %368 = vmatpush.bf16.msra.mxu0 0
      %369 = vmatpush.bf16.msra.mxu0 0
      %370 = vmatpush.bf16.msra.mxu0 0
      %371 = vmatpush.bf16.msra.mxu0 0
      %372 = vmatpush.bf16.msra.mxu0 0
      %373 = vmatpush.bf16.msra.mxu0 %v357
      %374 = vmatmul.bf16.gmra.mxu0 %v361
      %v375 = vpop.f32.mrf.mxu0
      %v376 = vadd.f32 0.0, %v375
      %v377 = vpop.f32.mrf.mxu0
      %v378 = vadd.f32 0.0, %v377
      %379 = vmatmul.bf16.gmra.mxu0 %v364
      %v380 = vpop.f32.mrf.mxu0
      %v381 = vadd.f32 0.0, %v380
      %v382 = vpop.f32.mrf.mxu0
      %v383 = vadd.f32 0.0, %v382
      %384 = vdwg.mxu0
      %v385 = vld [vmem:[%s2] sm:$0xff]
      %v386 = vld [vmem:[%s2 + $0x8] sm:$0xff]
      %v387 = vld [vmem:[%s2 + $0x10] sm:$0xff]
      %v388 = vld [vmem:[%s2 + $0x18] sm:$0xff]
      %390 = vset.pattern.permute.xlu0 0
      %391 = vperm.xlu0 %390, %v385
      %v392 = vpop.permute.xlu0 %391
      %395 = vset.pattern.permute.xlu0 0
      %396 = vperm.xlu0 %395, %v386
      %v397 = vpop.permute.xlu0 %396
      %400 = vset.pattern.permute.xlu0 0
      %401 = vperm.xlu0 %400, %v387
      %v402 = vpop.permute.xlu0 %401
      %405 = vset.pattern.permute.xlu0 0
      %406 = vperm.xlu0 %405, %v388
      %v407 = vpop.permute.xlu0 %406
      %v409 = vmul.f32 %v376, %v392
      %v410 = vmul.f32 %v378, %v397
      %v411 = vmul.f32 %v381, %v402
      %v412 = vmul.f32 %v383, %v407
      %v413 = vld [vmem:[%s3] sm:$0xff]
      %v414 = vld [vmem:[%s3 + $0x8] sm:$0xff]
      %v415 = vld [vmem:[%s3 + $0x10] sm:$0xff]
      %v416 = vld [vmem:[%s3 + $0x18] sm:$0xff]
      %418 = vset.pattern.permute.xlu0 0
      %419 = vperm.xlu0 %418, %v413
      %v420 = vpop.permute.xlu0 %419
      %423 = vset.pattern.permute.xlu0 0
      %424 = vperm.xlu0 %423, %v414
      %v425 = vpop.permute.xlu0 %424
      %428 = vset.pattern.permute.xlu0 0
      %429 = vperm.xlu0 %428, %v415
      %v430 = vpop.permute.xlu0 %429
      %433 = vset.pattern.permute.xlu0 0
      %434 = vperm.xlu0 %433, %v416
      %v435 = vpop.permute.xlu0 %434
      %v437 = vadd.f32 %v409, %v420
      %v438 = vadd.f32 %v410, %v425
      %v439 = vadd.f32 %v411, %v430
      %v440 = vadd.f32 %v412, %v435
      %v441 = vsub.f32 0.0, %v437
      %v442 = vsub.f32 0.0, %v438
      %v443 = vsub.f32 0.0, %v439
      %v444 = vsub.f32 0.0, %v440
      %v445 = vmul.f32 %v441, 1.442695
      %v446 = vpow.pop %v445
      %v447 = vmul.f32 %v442, 1.442695
      %v448 = vpow.pop %v447
      %v449 = vmul.f32 %v443, 1.442695
      %v450 = vpow.pop %v449
      %v451 = vmul.f32 %v444, 1.442695
      %v452 = vpow.pop %v451
      %v453 = vadd.f32 %v446, 1.0
      %v454 = vadd.f32 %v448, 1.0
      %v455 = vadd.f32 %v450, 1.0
      %v456 = vadd.f32 %v452, 1.0
      %v457 = vrcp.pop %v453
      %v458 = vrcp.pop %v454
      %v459 = vrcp.pop %v455
      %v460 = vrcp.pop %v456
      %v461 = vmul.f32 %v437, %v457
      %v462 = vmul.f32 %v438, %v458
      %v463 = vmul.f32 %v439, %v459
      %v464 = vmul.f32 %v440, %v460
      %v465 = vld [vmem:[#allocation2] sm:$0xff]
      %v466 = vld [vmem:[#allocation2 + $0x8] sm:$0xff]
      %v467 = vld [vmem:[#allocation2 + $0x10] sm:$0xff]
      %v468 = vld [vmem:[#allocation2 + $0x18] sm:$0xff]
      %469 = vadd.xlane.f32.xlu0 %v461
      %v470 = vpop.xlane.xlu0 %469
      %471 = vadd.xlane.f32.xlu0 %v462
      %v472 = vpop.xlane.xlu0 %471
      %473 = vadd.xlane.f32.xlu0 %v463
      %v474 = vpop.xlane.xlu0 %473
      %475 = vadd.xlane.f32.xlu0 %v464
      %v476 = vpop.xlane.xlu0 %475
      %v477 = vadd.f32 %v465, %v470
      %v478 = vadd.f32 %v466, %v472
      %v479 = vadd.f32 %v467, %v474
      %v480 = vadd.f32 %v468, %v476
      %vm481 = vcmask 7168
      %482 = vst.msk [vmem:[#allocation2] sm:$0xff] %vm481, %v477
      %483 = vst.msk [vmem:[#allocation2 + $0x8] sm:$0xff] %vm481, %v478
      %484 = vst.msk [vmem:[#allocation2 + $0x10] sm:$0xff] %vm481, %v479
      %485 = vst.msk [vmem:[#allocation2 + $0x18] sm:$0xff] %vm481, %v480
      // Predicated region
      $region57: #{hms_forward.1} parent=51 // pred_check
        %p486 = pneg %p328
      $region58: #{hms_forward.1} parent=51 // pred_check_branch
        %488 = sbr.rel (%p486) target = $region60
      $region59: #{hms_forward.1} parent=51 // pred_region
        %v489 = vld [vmem:[#allocation2] sm:$0xff]
        %v490 = vld [vmem:[#allocation2 + $0x8] sm:$0xff]
        %v491 = vld [vmem:[#allocation2 + $0x10] sm:$0xff]
        %v492 = vld [vmem:[#allocation2 + $0x18] sm:$0xff]
        %v493 = vld [vmem:[%s3] sm:$0xff]
        %v494 = vld [vmem:[%s3 + $0x8] sm:$0xff]
        %v495 = vld [vmem:[%s3 + $0x10] sm:$0xff]
        %v496 = vld [vmem:[%s3 + $0x18] sm:$0xff]
        %v497 = vsub.f32 0.0, %v493
        %v498 = vsub.f32 0.0, %v494
        %v499 = vsub.f32 0.0, %v495
        %v500 = vsub.f32 0.0, %v496
        %v501 = vmul.f32 %v497, 1.442695
        %v502 = vpow.pop %v501
        %v503 = vmul.f32 %v498, 1.442695
        %v504 = vpow.pop %v503
        %v505 = vmul.f32 %v499, 1.442695
        %v506 = vpow.pop %v505
        %v507 = vmul.f32 %v500, 1.442695
        %v508 = vpow.pop %v507
        %v509 = vadd.f32 %v502, 1.0
        %v510 = vadd.f32 %v504, 1.0
        %v511 = vadd.f32 %v506, 1.0
        %v512 = vadd.f32 %v508, 1.0
        %v513 = vrcp.pop %v509
        %v514 = vrcp.pop %v510
        %v515 = vrcp.pop %v511
        %v516 = vrcp.pop %v512
        %v517 = vmul.f32 %v493, %v513
        %v518 = vmul.f32 %v494, %v514
        %v519 = vmul.f32 %v495, %v515
        %v520 = vmul.f32 %v496, %v516
        %v521 = vmul.f32 %v517, 64.0
        %v522 = vmul.f32 %v518, 64.0
        %v523 = vmul.f32 %v519, 64.0
        %v524 = vmul.f32 %v520, 64.0
        %v525 = vsub.f32 %v489, %v521
        %v526 = vsub.f32 %v490, %v522
        %v527 = vsub.f32 %v491, %v523
        %v528 = vsub.f32 %v492, %v524
        %v529 = vmul.f32 %v525, 0.015625
        %v530 = vmul.f32 %v526, 0.015625
        %v531 = vmul.f32 %v527, 0.015625
        %v532 = vmul.f32 %v528, 0.015625
        %v533 = vld [vmem:[%s4] sm:$0xff]
        %v534 = vld [vmem:[%s4 + $0x8] sm:$0xff]
        %v535 = vld [vmem:[%s4 + $0x10] sm:$0xff]
        %v536 = vld [vmem:[%s4 + $0x18] sm:$0xff]
        %v537 = vld [vmem:[%s4 + $0x20] sm:$0xff]
        %v538 = vld [vmem:[%s4 + $0x28] sm:$0xff]
        %v539 = vld [vmem:[%s4 + $0x30] sm:$0xff]
        %v540 = vld [vmem:[%s4 + $0x38] sm:$0xff]
        %v541 = vld [vmem:[%s4 + $0x40] sm:$0xff]
        %v542 = vld [vmem:[%s4 + $0x48] sm:$0xff]
        %v543 = vld [vmem:[%s4 + $0x50] sm:$0xff]
        %v544 = vld [vmem:[%s4 + $0x58] sm:$0xff]
        %v545 = vld [vmem:[%s4 + $0x60] sm:$0xff]
        %v546 = vld [vmem:[%s4 + $0x68] sm:$0xff]
        %v547 = vld [vmem:[%s4 + $0x70] sm:$0xff]
        %v548 = vld [vmem:[%s4 + $0x78] sm:$0xff]
        %v549 = vld [vmem:[%s4 + $0x80] sm:$0xff]
        %v550 = vld [vmem:[%s4 + $0x88] sm:$0xff]
        %v551 = vld [vmem:[%s4 + $0x90] sm:$0xff]
        %v552 = vld [vmem:[%s4 + $0x98] sm:$0xff]
        %v553 = vld [vmem:[%s4 + $0xa0] sm:$0xff]
        %v554 = vld [vmem:[%s4 + $0xa8] sm:$0xff]
        %v555 = vld [vmem:[%s4 + $0xb0] sm:$0xff]
        %v556 = vld [vmem:[%s4 + $0xb8] sm:$0xff]
        %v557 = vld [vmem:[%s4 + $0xc0] sm:$0xff]
        %v558 = vld [vmem:[%s4 + $0xc8] sm:$0xff]
        %v559 = vld [vmem:[%s4 + $0xd0] sm:$0xff]
        %v560 = vld [vmem:[%s4 + $0xd8] sm:$0xff]
        %v561 = vld [vmem:[%s4 + $0xe0] sm:$0xff]
        %v562 = vld [vmem:[%s4 + $0xe8] sm:$0xff]
        %v563 = vld [vmem:[%s4 + $0xf0] sm:$0xff]
        %v564 = vld [vmem:[%s4 + $0xf8] sm:$0xff]
        %v565 = vld [vmem:[%s4 + $0x100] sm:$0xff]
        %v566 = vld [vmem:[%s4 + $0x108] sm:$0xff]
        %v567 = vld [vmem:[%s4 + $0x110] sm:$0xff]
        %v568 = vld [vmem:[%s4 + $0x118] sm:$0xff]
        %v569 = vld [vmem:[%s4 + $0x120] sm:$0xff]
        %v570 = vld [vmem:[%s4 + $0x128] sm:$0xff]
        %v571 = vld [vmem:[%s4 + $0x130] sm:$0xff]
        %v572 = vld [vmem:[%s4 + $0x138] sm:$0xff]
        %v573 = vld [vmem:[%s4 + $0x140] sm:$0xff]
        %v574 = vld [vmem:[%s4 + $0x148] sm:$0xff]
        %v575 = vld [vmem:[%s4 + $0x150] sm:$0xff]
        %v576 = vld [vmem:[%s4 + $0x158] sm:$0xff]
        %v577 = vld [vmem:[%s4 + $0x160] sm:$0xff]
        %v578 = vld [vmem:[%s4 + $0x168] sm:$0xff]
        %v579 = vld [vmem:[%s4 + $0x170] sm:$0xff]
        %v580 = vld [vmem:[%s4 + $0x178] sm:$0xff]
        %v581 = vld [vmem:[%s4 + $0x180] sm:$0xff]
        %v582 = vld [vmem:[%s4 + $0x188] sm:$0xff]
        %v583 = vld [vmem:[%s4 + $0x190] sm:$0xff]
        %v584 = vld [vmem:[%s4 + $0x198] sm:$0xff]
        %v585 = vld [vmem:[%s4 + $0x1a0] sm:$0xff]
        %v586 = vld [vmem:[%s4 + $0x1a8] sm:$0xff]
        %v587 = vld [vmem:[%s4 + $0x1b0] sm:$0xff]
        %v588 = vld [vmem:[%s4 + $0x1b8] sm:$0xff]
        %v589 = vld [vmem:[%s4 + $0x1c0] sm:$0xff]
        %v590 = vld [vmem:[%s4 + $0x1c8] sm:$0xff]
        %v591 = vld [vmem:[%s4 + $0x1d0] sm:$0xff]
        %v592 = vld [vmem:[%s4 + $0x1d8] sm:$0xff]
        %v593 = vld [vmem:[%s4 + $0x1e0] sm:$0xff]
        %v594 = vld [vmem:[%s4 + $0x1e8] sm:$0xff]
        %v595 = vld [vmem:[%s4 + $0x1f0] sm:$0xff]
        %v596 = vld [vmem:[%s4 + $0x1f8] sm:$0xff]
        %v597 = vld [vmem:[%s4 + $0x200] sm:$0xff]
        %v598 = vld [vmem:[%s4 + $0x208] sm:$0xff]
        %v599 = vld [vmem:[%s4 + $0x210] sm:$0xff]
        %v600 = vld [vmem:[%s4 + $0x218] sm:$0xff]
        %v601 = vld [vmem:[%s4 + $0x220] sm:$0xff]
        %v602 = vld [vmem:[%s4 + $0x228] sm:$0xff]
        %v603 = vld [vmem:[%s4 + $0x230] sm:$0xff]
        %v604 = vld [vmem:[%s4 + $0x238] sm:$0xff]
        %v605 = vld [vmem:[%s4 + $0x240] sm:$0xff]
        %v606 = vld [vmem:[%s4 + $0x248] sm:$0xff]
        %v607 = vld [vmem:[%s4 + $0x250] sm:$0xff]
        %v608 = vld [vmem:[%s4 + $0x258] sm:$0xff]
        %v609 = vld [vmem:[%s4 + $0x260] sm:$0xff]
        %v610 = vld [vmem:[%s4 + $0x268] sm:$0xff]
        %v611 = vld [vmem:[%s4 + $0x270] sm:$0xff]
        %v612 = vld [vmem:[%s4 + $0x278] sm:$0xff]
        %v613 = vld [vmem:[%s4 + $0x280] sm:$0xff]
        %v614 = vld [vmem:[%s4 + $0x288] sm:$0xff]
        %v615 = vld [vmem:[%s4 + $0x290] sm:$0xff]
        %v616 = vld [vmem:[%s4 + $0x298] sm:$0xff]
        %v617 = vld [vmem:[%s4 + $0x2a0] sm:$0xff]
        %v618 = vld [vmem:[%s4 + $0x2a8] sm:$0xff]
        %v619 = vld [vmem:[%s4 + $0x2b0] sm:$0xff]
        %v620 = vld [vmem:[%s4 + $0x2b8] sm:$0xff]
        %v621 = vld [vmem:[%s4 + $0x2c0] sm:$0xff]
        %v622 = vld [vmem:[%s4 + $0x2c8] sm:$0xff]
        %v623 = vld [vmem:[%s4 + $0x2d0] sm:$0xff]
        %v624 = vld [vmem:[%s4 + $0x2d8] sm:$0xff]
        %v625 = vld [vmem:[%s4 + $0x2e0] sm:$0xff]
        %v626 = vld [vmem:[%s4 + $0x2e8] sm:$0xff]
        %v627 = vld [vmem:[%s4 + $0x2f0] sm:$0xff]
        %v628 = vld [vmem:[%s4 + $0x2f8] sm:$0xff]
        %v629 = vld [vmem:[%s4 + $0x300] sm:$0xff]
        %v630 = vld [vmem:[%s4 + $0x308] sm:$0xff]
        %v631 = vld [vmem:[%s4 + $0x310] sm:$0xff]
        %v632 = vld [vmem:[%s4 + $0x318] sm:$0xff]
        %v633 = vld [vmem:[%s4 + $0x320] sm:$0xff]
        %v634 = vld [vmem:[%s4 + $0x328] sm:$0xff]
        %v635 = vld [vmem:[%s4 + $0x330] sm:$0xff]
        %v636 = vld [vmem:[%s4 + $0x338] sm:$0xff]
        %v637 = vld [vmem:[%s4 + $0x340] sm:$0xff]
        %v638 = vld [vmem:[%s4 + $0x348] sm:$0xff]
        %v639 = vld [vmem:[%s4 + $0x350] sm:$0xff]
        %v640 = vld [vmem:[%s4 + $0x358] sm:$0xff]
        %v641 = vld [vmem:[%s4 + $0x360] sm:$0xff]
        %v642 = vld [vmem:[%s4 + $0x368] sm:$0xff]
        %v643 = vld [vmem:[%s4 + $0x370] sm:$0xff]
        %v644 = vld [vmem:[%s4 + $0x378] sm:$0xff]
        %v645 = vld [vmem:[%s4 + $0x380] sm:$0xff]
        %v646 = vld [vmem:[%s4 + $0x388] sm:$0xff]
        %v647 = vld [vmem:[%s4 + $0x390] sm:$0xff]
        %v648 = vld [vmem:[%s4 + $0x398] sm:$0xff]
        %v649 = vld [vmem:[%s4 + $0x3a0] sm:$0xff]
        %v650 = vld [vmem:[%s4 + $0x3a8] sm:$0xff]
        %v651 = vld [vmem:[%s4 + $0x3b0] sm:$0xff]
        %v652 = vld [vmem:[%s4 + $0x3b8] sm:$0xff]
        %v653 = vld [vmem:[%s4 + $0x3c0] sm:$0xff]
        %v654 = vld [vmem:[%s4 + $0x3c8] sm:$0xff]
        %v655 = vld [vmem:[%s4 + $0x3d0] sm:$0xff]
        %v656 = vld [vmem:[%s4 + $0x3d8] sm:$0xff]
        %v657 = vld [vmem:[%s4 + $0x3e0] sm:$0xff]
        %v658 = vld [vmem:[%s4 + $0x3e8] sm:$0xff]
        %v659 = vld [vmem:[%s4 + $0x3f0] sm:$0xff]
        %v660 = vld [vmem:[%s4 + $0x3f8] sm:$0xff]
        %v661 = vld [vmem:[%s4 + $0x400] sm:$0xff]
        %v662 = vld [vmem:[%s4 + $0x408] sm:$0xff]
        %v663 = vld [vmem:[%s4 + $0x410] sm:$0xff]
        %v664 = vld [vmem:[%s4 + $0x418] sm:$0xff]
        %v665 = vld [vmem:[%s4 + $0x420] sm:$0xff]
        %v666 = vld [vmem:[%s4 + $0x428] sm:$0xff]
        %v667 = vld [vmem:[%s4 + $0x430] sm:$0xff]
        %v668 = vld [vmem:[%s4 + $0x438] sm:$0xff]
        %v669 = vld [vmem:[%s4 + $0x440] sm:$0xff]
        %v670 = vld [vmem:[%s4 + $0x448] sm:$0xff]
        %v671 = vld [vmem:[%s4 + $0x450] sm:$0xff]
        %v672 = vld [vmem:[%s4 + $0x458] sm:$0xff]
        %v673 = vld [vmem:[%s4 + $0x460] sm:$0xff]
        %v674 = vld [vmem:[%s4 + $0x468] sm:$0xff]
        %v675 = vld [vmem:[%s4 + $0x470] sm:$0xff]
        %v676 = vld [vmem:[%s4 + $0x478] sm:$0xff]
        %v677 = vld [vmem:[%s4 + $0x480] sm:$0xff]
        %v678 = vld [vmem:[%s4 + $0x488] sm:$0xff]
        %v679 = vld [vmem:[%s4 + $0x490] sm:$0xff]
        %v680 = vld [vmem:[%s4 + $0x498] sm:$0xff]
        %v681 = vld [vmem:[%s4 + $0x4a0] sm:$0xff]
        %v682 = vld [vmem:[%s4 + $0x4a8] sm:$0xff]
        %v683 = vld [vmem:[%s4 + $0x4b0] sm:$0xff]
        %v684 = vld [vmem:[%s4 + $0x4b8] sm:$0xff]
        %v685 = vld [vmem:[%s4 + $0x4c0] sm:$0xff]
        %v686 = vld [vmem:[%s4 + $0x4c8] sm:$0xff]
        %v687 = vld [vmem:[%s4 + $0x4d0] sm:$0xff]
        %v688 = vld [vmem:[%s4 + $0x4d8] sm:$0xff]
        %v689 = vld [vmem:[%s4 + $0x4e0] sm:$0xff]
        %v690 = vld [vmem:[%s4 + $0x4e8] sm:$0xff]
        %v691 = vld [vmem:[%s4 + $0x4f0] sm:$0xff]
        %v692 = vld [vmem:[%s4 + $0x4f8] sm:$0xff]
        %v693 = vld [vmem:[%s5] sm:$0xff]
        %v694 = vld [vmem:[%s5 + $0x8] sm:$0xff]
        %v695 = vld [vmem:[%s5 + $0x10] sm:$0xff]
        %v696 = vld [vmem:[%s5 + $0x18] sm:$0xff]
        %v697 = vld [vmem:[%s5 + $0x20] sm:$0xff]
        %v698 = vld [vmem:[%s5 + $0x28] sm:$0xff]
        %v699 = vld [vmem:[%s5 + $0x30] sm:$0xff]
        %v700 = vld [vmem:[%s5 + $0x38] sm:$0xff]
        %v701 = vld [vmem:[%s5 + $0x40] sm:$0xff]
        %v702 = vld [vmem:[%s5 + $0x48] sm:$0xff]
        %v703 = vld [vmem:[%s5 + $0x50] sm:$0xff]
        %v704 = vld [vmem:[%s5 + $0x58] sm:$0xff]
        %v705 = vld [vmem:[%s5 + $0x60] sm:$0xff]
        %v706 = vld [vmem:[%s5 + $0x68] sm:$0xff]
        %v707 = vld [vmem:[%s5 + $0x70] sm:$0xff]
        %v708 = vld [vmem:[%s5 + $0x78] sm:$0xff]
        %v709 = vld [vmem:[%s5 + $0x80] sm:$0xff]
        %v710 = vld [vmem:[%s5 + $0x88] sm:$0xff]
        %v711 = vld [vmem:[%s5 + $0x90] sm:$0xff]
        %v712 = vld [vmem:[%s5 + $0x98] sm:$0xff]
        %v713 = vld [vmem:[%s5 + $0xa0] sm:$0xff]
        %v714 = vld [vmem:[%s5 + $0xa8] sm:$0xff]
        %v715 = vld [vmem:[%s5 + $0xb0] sm:$0xff]
        %v716 = vld [vmem:[%s5 + $0xb8] sm:$0xff]
        %v717 = vld [vmem:[%s5 + $0xc0] sm:$0xff]
        %v718 = vld [vmem:[%s5 + $0xc8] sm:$0xff]
        %v719 = vld [vmem:[%s5 + $0xd0] sm:$0xff]
        %v720 = vld [vmem:[%s5 + $0xd8] sm:$0xff]
        %v721 = vld [vmem:[%s5 + $0xe0] sm:$0xff]
        %v722 = vld [vmem:[%s5 + $0xe8] sm:$0xff]
        %v723 = vld [vmem:[%s5 + $0xf0] sm:$0xff]
        %v724 = vld [vmem:[%s5 + $0xf8] sm:$0xff]
        %v725 = vld [vmem:[%s5 + $0x100] sm:$0xff]
        %v726 = vld [vmem:[%s5 + $0x108] sm:$0xff]
        %v727 = vld [vmem:[%s5 + $0x110] sm:$0xff]
        %v728 = vld [vmem:[%s5 + $0x118] sm:$0xff]
        %v729 = vld [vmem:[%s5 + $0x120] sm:$0xff]
        %v730 = vld [vmem:[%s5 + $0x128] sm:$0xff]
        %v731 = vld [vmem:[%s5 + $0x130] sm:$0xff]
        %v732 = vld [vmem:[%s5 + $0x138] sm:$0xff]
        %v733 = vld [vmem:[%s5 + $0x140] sm:$0xff]
        %v734 = vld [vmem:[%s5 + $0x148] sm:$0xff]
        %v735 = vld [vmem:[%s5 + $0x150] sm:$0xff]
        %v736 = vld [vmem:[%s5 + $0x158] sm:$0xff]
        %v737 = vld [vmem:[%s5 + $0x160] sm:$0xff]
        %v738 = vld [vmem:[%s5 + $0x168] sm:$0xff]
        %v739 = vld [vmem:[%s5 + $0x170] sm:$0xff]
        %v740 = vld [vmem:[%s5 + $0x178] sm:$0xff]
        %v741 = vld [vmem:[%s5 + $0x180] sm:$0xff]
        %v742 = vld [vmem:[%s5 + $0x188] sm:$0xff]
        %v743 = vld [vmem:[%s5 + $0x190] sm:$0xff]
        %v744 = vld [vmem:[%s5 + $0x198] sm:$0xff]
        %v745 = vld [vmem:[%s5 + $0x1a0] sm:$0xff]
        %v746 = vld [vmem:[%s5 + $0x1a8] sm:$0xff]
        %v747 = vld [vmem:[%s5 + $0x1b0] sm:$0xff]
        %v748 = vld [vmem:[%s5 + $0x1b8] sm:$0xff]
        %v749 = vld [vmem:[%s5 + $0x1c0] sm:$0xff]
        %v750 = vld [vmem:[%s5 + $0x1c8] sm:$0xff]
        %v751 = vld [vmem:[%s5 + $0x1d0] sm:$0xff]
        %v752 = vld [vmem:[%s5 + $0x1d8] sm:$0xff]
        %v753 = vld [vmem:[%s5 + $0x1e0] sm:$0xff]
        %v754 = vld [vmem:[%s5 + $0x1e8] sm:$0xff]
        %v755 = vld [vmem:[%s5 + $0x1f0] sm:$0xff]
        %v756 = vld [vmem:[%s5 + $0x1f8] sm:$0xff]
        %v757 = vld [vmem:[%s5 + $0x200] sm:$0xff]
        %v758 = vld [vmem:[%s5 + $0x208] sm:$0xff]
        %v759 = vld [vmem:[%s5 + $0x210] sm:$0xff]
        %v760 = vld [vmem:[%s5 + $0x218] sm:$0xff]
        %v761 = vld [vmem:[%s5 + $0x220] sm:$0xff]
        %v762 = vld [vmem:[%s5 + $0x228] sm:$0xff]
        %v763 = vld [vmem:[%s5 + $0x230] sm:$0xff]
        %v764 = vld [vmem:[%s5 + $0x238] sm:$0xff]
        %v765 = vld [vmem:[%s5 + $0x240] sm:$0xff]
        %v766 = vld [vmem:[%s5 + $0x248] sm:$0xff]
        %v767 = vld [vmem:[%s5 + $0x250] sm:$0xff]
        %v768 = vld [vmem:[%s5 + $0x258] sm:$0xff]
        %v769 = vld [vmem:[%s5 + $0x260] sm:$0xff]
        %v770 = vld [vmem:[%s5 + $0x268] sm:$0xff]
        %v771 = vld [vmem:[%s5 + $0x270] sm:$0xff]
        %v772 = vld [vmem:[%s5 + $0x278] sm:$0xff]
        %v773 = vld [vmem:[%s5 + $0x280] sm:$0xff]
        %v774 = vld [vmem:[%s5 + $0x288] sm:$0xff]
        %v775 = vld [vmem:[%s5 + $0x290] sm:$0xff]
        %v776 = vld [vmem:[%s5 + $0x298] sm:$0xff]
        %v777 = vld [vmem:[%s5 + $0x2a0] sm:$0xff]
        %v778 = vld [vmem:[%s5 + $0x2a8] sm:$0xff]
        %v779 = vld [vmem:[%s5 + $0x2b0] sm:$0xff]
        %v780 = vld [vmem:[%s5 + $0x2b8] sm:$0xff]
        %v781 = vld [vmem:[%s5 + $0x2c0] sm:$0xff]
        %v782 = vld [vmem:[%s5 + $0x2c8] sm:$0xff]
        %v783 = vld [vmem:[%s5 + $0x2d0] sm:$0xff]
        %v784 = vld [vmem:[%s5 + $0x2d8] sm:$0xff]
        %v785 = vld [vmem:[%s5 + $0x2e0] sm:$0xff]
        %v786 = vld [vmem:[%s5 + $0x2e8] sm:$0xff]
        %v787 = vld [vmem:[%s5 + $0x2f0] sm:$0xff]
        %v788 = vld [vmem:[%s5 + $0x2f8] sm:$0xff]
        %v789 = vld [vmem:[%s5 + $0x300] sm:$0xff]
        %v790 = vld [vmem:[%s5 + $0x308] sm:$0xff]
        %v791 = vld [vmem:[%s5 + $0x310] sm:$0xff]
        %v792 = vld [vmem:[%s5 + $0x318] sm:$0xff]
        %v793 = vld [vmem:[%s5 + $0x320] sm:$0xff]
        %v794 = vld [vmem:[%s5 + $0x328] sm:$0xff]
        %v795 = vld [vmem:[%s5 + $0x330] sm:$0xff]
        %v796 = vld [vmem:[%s5 + $0x338] sm:$0xff]
        %v797 = vld [vmem:[%s5 + $0x340] sm:$0xff]
        %v798 = vld [vmem:[%s5 + $0x348] sm:$0xff]
        %v799 = vld [vmem:[%s5 + $0x350] sm:$0xff]
        %v800 = vld [vmem:[%s5 + $0x358] sm:$0xff]
        %v801 = vld [vmem:[%s5 + $0x360] sm:$0xff]
        %v802 = vld [vmem:[%s5 + $0x368] sm:$0xff]
        %v803 = vld [vmem:[%s5 + $0x370] sm:$0xff]
        %v804 = vld [vmem:[%s5 + $0x378] sm:$0xff]
        %v805 = vld [vmem:[%s5 + $0x380] sm:$0xff]
        %v806 = vld [vmem:[%s5 + $0x388] sm:$0xff]
        %v807 = vld [vmem:[%s5 + $0x390] sm:$0xff]
        %v808 = vld [vmem:[%s5 + $0x398] sm:$0xff]
        %v809 = vld [vmem:[%s5 + $0x3a0] sm:$0xff]
        %v810 = vld [vmem:[%s5 + $0x3a8] sm:$0xff]
        %v811 = vld [vmem:[%s5 + $0x3b0] sm:$0xff]
        %v812 = vld [vmem:[%s5 + $0x3b8] sm:$0xff]
        %v813 = vld [vmem:[%s5 + $0x3c0] sm:$0xff]
        %v814 = vld [vmem:[%s5 + $0x3c8] sm:$0xff]
        %v815 = vld [vmem:[%s5 + $0x3d0] sm:$0xff]
        %v816 = vld [vmem:[%s5 + $0x3d8] sm:$0xff]
        %v817 = vld [vmem:[%s5 + $0x3e0] sm:$0xff]
        %v818 = vld [vmem:[%s5 + $0x3e8] sm:$0xff]
        %v819 = vld [vmem:[%s5 + $0x3f0] sm:$0xff]
        %v820 = vld [vmem:[%s5 + $0x3f8] sm:$0xff]
        %v821 = vld [vmem:[%s5 + $0x400] sm:$0xff]
        %v822 = vld [vmem:[%s5 + $0x408] sm:$0xff]
        %v823 = vld [vmem:[%s5 + $0x410] sm:$0xff]
        %v824 = vld [vmem:[%s5 + $0x418] sm:$0xff]
        %v825 = vld [vmem:[%s5 + $0x420] sm:$0xff]
        %v826 = vld [vmem:[%s5 + $0x428] sm:$0xff]
        %v827 = vld [vmem:[%s5 + $0x430] sm:$0xff]
        %v828 = vld [vmem:[%s5 + $0x438] sm:$0xff]
        %v829 = vld [vmem:[%s5 + $0x440] sm:$0xff]
        %v830 = vld [vmem:[%s5 + $0x448] sm:$0xff]
        %v831 = vld [vmem:[%s5 + $0x450] sm:$0xff]
        %v832 = vld [vmem:[%s5 + $0x458] sm:$0xff]
        %v833 = vld [vmem:[%s5 + $0x460] sm:$0xff]
        %v834 = vld [vmem:[%s5 + $0x468] sm:$0xff]
        %v835 = vld [vmem:[%s5 + $0x470] sm:$0xff]
        %v836 = vld [vmem:[%s5 + $0x478] sm:$0xff]
        %v837 = vld [vmem:[%s5 + $0x480] sm:$0xff]
        %v838 = vld [vmem:[%s5 + $0x488] sm:$0xff]
        %v839 = vld [vmem:[%s5 + $0x490] sm:$0xff]
        %v840 = vld [vmem:[%s5 + $0x498] sm:$0xff]
        %v841 = vld [vmem:[%s5 + $0x4a0] sm:$0xff]
        %v842 = vld [vmem:[%s5 + $0x4a8] sm:$0xff]
        %v843 = vld [vmem:[%s5 + $0x4b0] sm:$0xff]
        %v844 = vld [vmem:[%s5 + $0x4b8] sm:$0xff]
        %v845 = vld [vmem:[%s5 + $0x4c0] sm:$0xff]
        %v846 = vld [vmem:[%s5 + $0x4c8] sm:$0xff]
        %v847 = vld [vmem:[%s5 + $0x4d0] sm:$0xff]
        %v848 = vld [vmem:[%s5 + $0x4d8] sm:$0xff]
        %v849 = vld [vmem:[%s5 + $0x4e0] sm:$0xff]
        %v850 = vld [vmem:[%s5 + $0x4e8] sm:$0xff]
        %v851 = vld [vmem:[%s5 + $0x4f0] sm:$0xff]
        %v852 = vld [vmem:[%s5 + $0x4f8] sm:$0xff]
        %vm853 = vcmask 261120
        %v855 = vsel %vm853, %v533, 0
        %v858 = vsel %vm853, %v534, 0
        %v861 = vsel %vm853, %v535, 0
        %v864 = vsel %vm853, %v536, 0
        %v867 = vsel %vm853, %v537, 0
        %v870 = vsel %vm853, %v538, 0
        %v873 = vsel %vm853, %v539, 0
        %v876 = vsel %vm853, %v540, 0
        %v879 = vsel %vm853, %v541, 0
        %v882 = vsel %vm853, %v542, 0
        %v885 = vsel %vm853, %v543, 0
        %v888 = vsel %vm853, %v544, 0
        %v891 = vsel %vm853, %v545, 0
        %v894 = vsel %vm853, %v546, 0
        %v897 = vsel %vm853, %v547, 0
        %v900 = vsel %vm853, %v548, 0
        %v903 = vsel %vm853, %v549, 0
        %v906 = vsel %vm853, %v550, 0
        %v909 = vsel %vm853, %v551, 0
        %v912 = vsel %vm853, %v552, 0
        %v915 = vsel %vm853, %v553, 0
        %v918 = vsel %vm853, %v554, 0
        %v921 = vsel %vm853, %v555, 0
        %v924 = vsel %vm853, %v556, 0
        %v927 = vsel %vm853, %v557, 0
        %v930 = vsel %vm853, %v558, 0
        %v933 = vsel %vm853, %v559, 0
        %v936 = vsel %vm853, %v560, 0
        %v939 = vsel %vm853, %v561, 0
        %v942 = vsel %vm853, %v562, 0
        %v945 = vsel %vm853, %v563, 0
        %v948 = vsel %vm853, %v564, 0
        %v951 = vsel %vm853, %v565, 0
        %v954 = vsel %vm853, %v566, 0
        %v957 = vsel %vm853, %v567, 0
        %v960 = vsel %vm853, %v568, 0
        %v963 = vsel %vm853, %v569, 0
        %v966 = vsel %vm853, %v570, 0
        %v969 = vsel %vm853, %v571, 0
        %v972 = vsel %vm853, %v572, 0
        %v975 = vsel %vm853, %v573, 0
        %v978 = vsel %vm853, %v574, 0
        %v981 = vsel %vm853, %v575, 0
        %v984 = vsel %vm853, %v576, 0
        %v987 = vsel %vm853, %v577, 0
        %v990 = vsel %vm853, %v578, 0
        %v993 = vsel %vm853, %v579, 0
        %v996 = vsel %vm853, %v580, 0
        %v999 = vsel %vm853, %v581, 0
        %v1002 = vsel %vm853, %v582, 0
        %v1005 = vsel %vm853, %v583, 0
        %v1008 = vsel %vm853, %v584, 0
        %v1011 = vsel %vm853, %v585, 0
        %v1014 = vsel %vm853, %v586, 0
        %v1017 = vsel %vm853, %v587, 0
        %v1020 = vsel %vm853, %v588, 0
        %v1023 = vsel %vm853, %v589, 0
        %v1026 = vsel %vm853, %v590, 0
        %v1029 = vsel %vm853, %v591, 0
        %v1032 = vsel %vm853, %v592, 0
        %v1035 = vsel %vm853, %v593, 0
        %v1038 = vsel %vm853, %v594, 0
        %v1041 = vsel %vm853, %v595, 0
        %v1044 = vsel %vm853, %v596, 0
        %v1047 = vsel %vm853, %v597, 0
        %v1050 = vsel %vm853, %v598, 0
        %v1053 = vsel %vm853, %v599, 0
        %v1056 = vsel %vm853, %v600, 0
        %v1059 = vsel %vm853, %v601, 0
        %v1062 = vsel %vm853, %v602, 0
        %v1065 = vsel %vm853, %v603, 0
        %v1068 = vsel %vm853, %v604, 0
        %v1071 = vsel %vm853, %v605, 0
        %v1074 = vsel %vm853, %v606, 0
        %v1077 = vsel %vm853, %v607, 0
        %v1080 = vsel %vm853, %v608, 0
        %v1083 = vsel %vm853, %v609, 0
        %v1086 = vsel %vm853, %v610, 0
        %v1089 = vsel %vm853, %v611, 0
        %v1092 = vsel %vm853, %v612, 0
        %v1095 = vsel %vm853, %v613, 0
        %v1098 = vsel %vm853, %v614, 0
        %v1101 = vsel %vm853, %v615, 0
        %v1104 = vsel %vm853, %v616, 0
        %v1107 = vsel %vm853, %v617, 0
        %v1110 = vsel %vm853, %v618, 0
        %v1113 = vsel %vm853, %v619, 0
        %v1116 = vsel %vm853, %v620, 0
        %v1119 = vsel %vm853, %v621, 0
        %v1122 = vsel %vm853, %v622, 0
        %v1125 = vsel %vm853, %v623, 0
        %v1128 = vsel %vm853, %v624, 0
        %v1131 = vsel %vm853, %v625, 0
        %v1134 = vsel %vm853, %v626, 0
        %v1137 = vsel %vm853, %v627, 0
        %v1140 = vsel %vm853, %v628, 0
        %v1143 = vsel %vm853, %v629, 0
        %v1146 = vsel %vm853, %v630, 0
        %v1149 = vsel %vm853, %v631, 0
        %v1152 = vsel %vm853, %v632, 0
        %v1155 = vsel %vm853, %v633, 0
        %v1158 = vsel %vm853, %v634, 0
        %v1161 = vsel %vm853, %v635, 0
        %v1164 = vsel %vm853, %v636, 0
        %v1167 = vsel %vm853, %v637, 0
        %v1170 = vsel %vm853, %v638, 0
        %v1173 = vsel %vm853, %v639, 0
        %v1176 = vsel %vm853, %v640, 0
        %v1179 = vsel %vm853, %v641, 0
        %v1182 = vsel %vm853, %v642, 0
        %v1185 = vsel %vm853, %v643, 0
        %v1188 = vsel %vm853, %v644, 0
        %v1191 = vsel %vm853, %v645, 0
        %v1194 = vsel %vm853, %v646, 0
        %v1197 = vsel %vm853, %v647, 0
        %v1200 = vsel %vm853, %v648, 0
        %v1203 = vsel %vm853, %v649, 0
        %v1206 = vsel %vm853, %v650, 0
        %v1209 = vsel %vm853, %v651, 0
        %v1212 = vsel %vm853, %v652, 0
        %v1215 = vsel %vm853, %v653, 0
        %v1218 = vsel %vm853, %v654, 0
        %v1221 = vsel %vm853, %v655, 0
        %v1224 = vsel %vm853, %v656, 0
        %v1227 = vsel %vm853, %v657, 0
        %v1230 = vsel %vm853, %v658, 0
        %v1233 = vsel %vm853, %v659, 0
        %v1236 = vsel %vm853, %v660, 0
        %v1239 = vsel %vm853, %v661, 0
        %v1242 = vsel %vm853, %v662, 0
        %v1245 = vsel %vm853, %v663, 0
        %v1248 = vsel %vm853, %v664, 0
        %v1251 = vsel %vm853, %v665, 0
        %v1254 = vsel %vm853, %v666, 0
        %v1257 = vsel %vm853, %v667, 0
        %v1260 = vsel %vm853, %v668, 0
        %v1263 = vsel %vm853, %v669, 0
        %v1266 = vsel %vm853, %v670, 0
        %v1269 = vsel %vm853, %v671, 0
        %v1272 = vsel %vm853, %v672, 0
        %v1275 = vsel %vm853, %v673, 0
        %v1278 = vsel %vm853, %v674, 0
        %v1281 = vsel %vm853, %v675, 0
        %v1284 = vsel %vm853, %v676, 0
        %v1287 = vsel %vm853, %v677, 0
        %v1290 = vsel %vm853, %v678, 0
        %v1293 = vsel %vm853, %v679, 0
        %v1296 = vsel %vm853, %v680, 0
        %v1299 = vsel %vm853, %v681, 0
        %v1302 = vsel %vm853, %v682, 0
        %v1305 = vsel %vm853, %v683, 0
        %v1308 = vsel %vm853, %v684, 0
        %v1311 = vsel %vm853, %v685, 0
        %v1314 = vsel %vm853, %v686, 0
        %v1317 = vsel %vm853, %v687, 0
        %v1320 = vsel %vm853, %v688, 0
        %v1323 = vsel %vm853, %v689, 0
        %v1326 = vsel %vm853, %v690, 0
        %v1329 = vsel %vm853, %v691, 0
        %v1332 = vsel %vm853, %v692, 0
        %1334 = vmatpush.msra.mxu0 0.0
        %1335 = vmatpush.msra.mxu0 0.0
        %1336 = vmatpush.msra.mxu0 0.0
        %1337 = vmatpush.msra.mxu0 0.0
        %1338 = vmatpush.msra.mxu0 0.0
        %1339 = vmatpush.msra.mxu0 0.0
        %1340 = vmatpush.msra.mxu0 0.0
        %1341 = vmatpush.msra.mxu0 0.0
        %1342 = vmatpush.msra.mxu0 0.0
        %1343 = vmatpush.msra.mxu0 0.0
        %1344 = vmatpush.msra.mxu0 0.0
        %1345 = vmatpush.msra.mxu0 0.0
        %1346 = vmatpush.msra.mxu0 %v532
        %1347 = vmatpush.msra.mxu0 %v531
        %1348 = vmatpush.msra.mxu0 %v530
        %1349 = vmatpush.msra.mxu0 %v529
        %1350 = vmatmul.f32.gmra.mxu0 %v855
        %v1351 = vpop.f32.mrf.mxu0
        %v1352 = vadd.f32 %v693, %v1351
        %1353 = vmatmul.f32.gmra.mxu0 %v858
        %v1354 = vpop.f32.mrf.mxu0
        %v1355 = vadd.f32 %v694, %v1354
        %1356 = vmatmul.f32.gmra.mxu0 %v861
        %v1357 = vpop.f32.mrf.mxu0
        %v1358 = vadd.f32 %v695, %v1357
        %1359 = vmatmul.f32.gmra.mxu0 %v864
        %v1360 = vpop.f32.mrf.mxu0
        %v1361 = vadd.f32 %v696, %v1360
        %1362 = vmatmul.f32.gmra.mxu0 %v867
        %v1363 = vpop.f32.mrf.mxu0
        %v1364 = vadd.f32 %v697, %v1363
        %1365 = vmatmul.f32.gmra.mxu0 %v870
        %v1366 = vpop.f32.mrf.mxu0
        %v1367 = vadd.f32 %v698, %v1366
        %1368 = vmatmul.f32.gmra.mxu0 %v873
        %v1369 = vpop.f32.mrf.mxu0
        %v1370 = vadd.f32 %v699, %v1369
        %1371 = vmatmul.f32.gmra.mxu0 %v876
        %v1372 = vpop.f32.mrf.mxu0
        %v1373 = vadd.f32 %v700, %v1372
        %1374 = vmatmul.f32.gmra.mxu0 %v879
        %v1375 = vpop.f32.mrf.mxu0
        %v1376 = vadd.f32 %v701, %v1375
        %1377 = vmatmul.f32.gmra.mxu0 %v882
        %v1378 = vpop.f32.mrf.mxu0
        %v1379 = vadd.f32 %v702, %v1378
        %1380 = vmatmul.f32.gmra.mxu0 %v885
        %v1381 = vpop.f32.mrf.mxu0
        %v1382 = vadd.f32 %v703, %v1381
        %1383 = vmatmul.f32.gmra.mxu0 %v888
        %v1384 = vpop.f32.mrf.mxu0
        %v1385 = vadd.f32 %v704, %v1384
        %1386 = vmatmul.f32.gmra.mxu0 %v891
        %v1387 = vpop.f32.mrf.mxu0
        %v1388 = vadd.f32 %v705, %v1387
        %1389 = vmatmul.f32.gmra.mxu0 %v894
        %v1390 = vpop.f32.mrf.mxu0
        %v1391 = vadd.f32 %v706, %v1390
        %1392 = vmatmul.f32.gmra.mxu0 %v897
        %v1393 = vpop.f32.mrf.mxu0
        %v1394 = vadd.f32 %v707, %v1393
        %1395 = vmatmul.f32.gmra.mxu0 %v900
        %v1396 = vpop.f32.mrf.mxu0
        %v1397 = vadd.f32 %v708, %v1396
        %1398 = vmatmul.f32.gmra.mxu0 %v903
        %v1399 = vpop.f32.mrf.mxu0
        %v1400 = vadd.f32 %v709, %v1399
        %1401 = vmatmul.f32.gmra.mxu0 %v906
        %v1402 = vpop.f32.mrf.mxu0
        %v1403 = vadd.f32 %v710, %v1402
        %1404 = vmatmul.f32.gmra.mxu0 %v909
        %v1405 = vpop.f32.mrf.mxu0
        %v1406 = vadd.f32 %v711, %v1405
        %1407 = vmatmul.f32.gmra.mxu0 %v912
        %v1408 = vpop.f32.mrf.mxu0
        %v1409 = vadd.f32 %v712, %v1408
        %1410 = vmatmul.f32.gmra.mxu0 %v915
        %v1411 = vpop.f32.mrf.mxu0
        %v1412 = vadd.f32 %v713, %v1411
        %1413 = vmatmul.f32.gmra.mxu0 %v918
        %v1414 = vpop.f32.mrf.mxu0
        %v1415 = vadd.f32 %v714, %v1414
        %1416 = vmatmul.f32.gmra.mxu0 %v921
        %v1417 = vpop.f32.mrf.mxu0
        %v1418 = vadd.f32 %v715, %v1417
        %1419 = vmatmul.f32.gmra.mxu0 %v924
        %v1420 = vpop.f32.mrf.mxu0
        %v1421 = vadd.f32 %v716, %v1420
        %1422 = vmatmul.f32.gmra.mxu0 %v927
        %v1423 = vpop.f32.mrf.mxu0
        %v1424 = vadd.f32 %v717, %v1423
        %1425 = vmatmul.f32.gmra.mxu0 %v930
        %v1426 = vpop.f32.mrf.mxu0
        %v1427 = vadd.f32 %v718, %v1426
        %1428 = vmatmul.f32.gmra.mxu0 %v933
        %v1429 = vpop.f32.mrf.mxu0
        %v1430 = vadd.f32 %v719, %v1429
        %1431 = vmatmul.f32.gmra.mxu0 %v936
        %v1432 = vpop.f32.mrf.mxu0
        %v1433 = vadd.f32 %v720, %v1432
        %1434 = vmatmul.f32.gmra.mxu0 %v939
        %v1435 = vpop.f32.mrf.mxu0
        %v1436 = vadd.f32 %v721, %v1435
        %1437 = vmatmul.f32.gmra.mxu0 %v942
        %v1438 = vpop.f32.mrf.mxu0
        %v1439 = vadd.f32 %v722, %v1438
        %1440 = vmatmul.f32.gmra.mxu0 %v945
        %v1441 = vpop.f32.mrf.mxu0
        %v1442 = vadd.f32 %v723, %v1441
        %1443 = vmatmul.f32.gmra.mxu0 %v948
        %v1444 = vpop.f32.mrf.mxu0
        %v1445 = vadd.f32 %v724, %v1444
        %1446 = vmatmul.f32.gmra.mxu0 %v951
        %v1447 = vpop.f32.mrf.mxu0
        %v1448 = vadd.f32 %v725, %v1447
        %1449 = vmatmul.f32.gmra.mxu0 %v954
        %v1450 = vpop.f32.mrf.mxu0
        %v1451 = vadd.f32 %v726, %v1450
        %1452 = vmatmul.f32.gmra.mxu0 %v957
        %v1453 = vpop.f32.mrf.mxu0
        %v1454 = vadd.f32 %v727, %v1453
        %1455 = vmatmul.f32.gmra.mxu0 %v960
        %v1456 = vpop.f32.mrf.mxu0
        %v1457 = vadd.f32 %v728, %v1456
        %1458 = vmatmul.f32.gmra.mxu0 %v963
        %v1459 = vpop.f32.mrf.mxu0
        %v1460 = vadd.f32 %v729, %v1459
        %1461 = vmatmul.f32.gmra.mxu0 %v966
        %v1462 = vpop.f32.mrf.mxu0
        %v1463 = vadd.f32 %v730, %v1462
        %1464 = vmatmul.f32.gmra.mxu0 %v969
        %v1465 = vpop.f32.mrf.mxu0
        %v1466 = vadd.f32 %v731, %v1465
        %1467 = vmatmul.f32.gmra.mxu0 %v972
        %v1468 = vpop.f32.mrf.mxu0
        %v1469 = vadd.f32 %v732, %v1468
        %1470 = vmatmul.f32.gmra.mxu0 %v975
        %v1471 = vpop.f32.mrf.mxu0
        %v1472 = vadd.f32 %v733, %v1471
        %1473 = vmatmul.f32.gmra.mxu0 %v978
        %v1474 = vpop.f32.mrf.mxu0
        %v1475 = vadd.f32 %v734, %v1474
        %1476 = vmatmul.f32.gmra.mxu0 %v981
        %v1477 = vpop.f32.mrf.mxu0
        %v1478 = vadd.f32 %v735, %v1477
        %1479 = vmatmul.f32.gmra.mxu0 %v984
        %v1480 = vpop.f32.mrf.mxu0
        %v1481 = vadd.f32 %v736, %v1480
        %1482 = vmatmul.f32.gmra.mxu0 %v987
        %v1483 = vpop.f32.mrf.mxu0
        %v1484 = vadd.f32 %v737, %v1483
        %1485 = vmatmul.f32.gmra.mxu0 %v990
        %v1486 = vpop.f32.mrf.mxu0
        %v1487 = vadd.f32 %v738, %v1486
        %1488 = vmatmul.f32.gmra.mxu0 %v993
        %v1489 = vpop.f32.mrf.mxu0
        %v1490 = vadd.f32 %v739, %v1489
        %1491 = vmatmul.f32.gmra.mxu0 %v996
        %v1492 = vpop.f32.mrf.mxu0
        %v1493 = vadd.f32 %v740, %v1492
        %1494 = vmatmul.f32.gmra.mxu0 %v999
        %v1495 = vpop.f32.mrf.mxu0
        %v1496 = vadd.f32 %v741, %v1495
        %1497 = vmatmul.f32.gmra.mxu0 %v1002
        %v1498 = vpop.f32.mrf.mxu0
        %v1499 = vadd.f32 %v742, %v1498
        %1500 = vmatmul.f32.gmra.mxu0 %v1005
        %v1501 = vpop.f32.mrf.mxu0
        %v1502 = vadd.f32 %v743, %v1501
        %1503 = vmatmul.f32.gmra.mxu0 %v1008
        %v1504 = vpop.f32.mrf.mxu0
        %v1505 = vadd.f32 %v744, %v1504
        %1506 = vmatmul.f32.gmra.mxu0 %v1011
        %v1507 = vpop.f32.mrf.mxu0
        %v1508 = vadd.f32 %v745, %v1507
        %1509 = vmatmul.f32.gmra.mxu0 %v1014
        %v1510 = vpop.f32.mrf.mxu0
        %v1511 = vadd.f32 %v746, %v1510
        %1512 = vmatmul.f32.gmra.mxu0 %v1017
        %v1513 = vpop.f32.mrf.mxu0
        %v1514 = vadd.f32 %v747, %v1513
        %1515 = vmatmul.f32.gmra.mxu0 %v1020
        %v1516 = vpop.f32.mrf.mxu0
        %v1517 = vadd.f32 %v748, %v1516
        %1518 = vmatmul.f32.gmra.mxu0 %v1023
        %v1519 = vpop.f32.mrf.mxu0
        %v1520 = vadd.f32 %v749, %v1519
        %1521 = vmatmul.f32.gmra.mxu0 %v1026
        %v1522 = vpop.f32.mrf.mxu0
        %v1523 = vadd.f32 %v750, %v1522
        %1524 = vmatmul.f32.gmra.mxu0 %v1029
        %v1525 = vpop.f32.mrf.mxu0
        %v1526 = vadd.f32 %v751, %v1525
        %1527 = vmatmul.f32.gmra.mxu0 %v1032
        %v1528 = vpop.f32.mrf.mxu0
        %v1529 = vadd.f32 %v752, %v1528
        %1530 = vmatmul.f32.gmra.mxu0 %v1035
        %v1531 = vpop.f32.mrf.mxu0
        %v1532 = vadd.f32 %v753, %v1531
        %1533 = vmatmul.f32.gmra.mxu0 %v1038
        %v1534 = vpop.f32.mrf.mxu0
        %v1535 = vadd.f32 %v754, %v1534
        %1536 = vmatmul.f32.gmra.mxu0 %v1041
        %v1537 = vpop.f32.mrf.mxu0
        %v1538 = vadd.f32 %v755, %v1537
        %1539 = vmatmul.f32.gmra.mxu0 %v1044
        %v1540 = vpop.f32.mrf.mxu0
        %v1541 = vadd.f32 %v756, %v1540
        %1542 = vmatmul.f32.gmra.mxu0 %v1047
        %v1543 = vpop.f32.mrf.mxu0
        %v1544 = vadd.f32 %v757, %v1543
        %1545 = vmatmul.f32.gmra.mxu0 %v1050
        %v1546 = vpop.f32.mrf.mxu0
        %v1547 = vadd.f32 %v758, %v1546
        %1548 = vmatmul.f32.gmra.mxu0 %v1053
        %v1549 = vpop.f32.mrf.mxu0
        %v1550 = vadd.f32 %v759, %v1549
        %1551 = vmatmul.f32.gmra.mxu0 %v1056
        %v1552 = vpop.f32.mrf.mxu0
        %v1553 = vadd.f32 %v760, %v1552
        %1554 = vmatmul.f32.gmra.mxu0 %v1059
        %v1555 = vpop.f32.mrf.mxu0
        %v1556 = vadd.f32 %v761, %v1555
        %1557 = vmatmul.f32.gmra.mxu0 %v1062
        %v1558 = vpop.f32.mrf.mxu0
        %v1559 = vadd.f32 %v762, %v1558
        %1560 = vmatmul.f32.gmra.mxu0 %v1065
        %v1561 = vpop.f32.mrf.mxu0
        %v1562 = vadd.f32 %v763, %v1561
        %1563 = vmatmul.f32.gmra.mxu0 %v1068
        %v1564 = vpop.f32.mrf.mxu0
        %v1565 = vadd.f32 %v764, %v1564
        %1566 = vmatmul.f32.gmra.mxu0 %v1071
        %v1567 = vpop.f32.mrf.mxu0
        %v1568 = vadd.f32 %v765, %v1567
        %1569 = vmatmul.f32.gmra.mxu0 %v1074
        %v1570 = vpop.f32.mrf.mxu0
        %v1571 = vadd.f32 %v766, %v1570
        %1572 = vmatmul.f32.gmra.mxu0 %v1077
        %v1573 = vpop.f32.mrf.mxu0
        %v1574 = vadd.f32 %v767, %v1573
        %1575 = vmatmul.f32.gmra.mxu0 %v1080
        %v1576 = vpop.f32.mrf.mxu0
        %v1577 = vadd.f32 %v768, %v1576
        %1578 = vmatmul.f32.gmra.mxu0 %v1083
        %v1579 = vpop.f32.mrf.mxu0
        %v1580 = vadd.f32 %v769, %v1579
        %1581 = vmatmul.f32.gmra.mxu0 %v1086
        %v1582 = vpop.f32.mrf.mxu0
        %v1583 = vadd.f32 %v770, %v1582
        %1584 = vmatmul.f32.gmra.mxu0 %v1089
        %v1585 = vpop.f32.mrf.mxu0
        %v1586 = vadd.f32 %v771, %v1585
        %1587 = vmatmul.f32.gmra.mxu0 %v1092
        %v1588 = vpop.f32.mrf.mxu0
        %v1589 = vadd.f32 %v772, %v1588
        %1590 = vmatmul.f32.gmra.mxu0 %v1095
        %v1591 = vpop.f32.mrf.mxu0
        %v1592 = vadd.f32 %v773, %v1591
        %1593 = vmatmul.f32.gmra.mxu0 %v1098
        %v1594 = vpop.f32.mrf.mxu0
        %v1595 = vadd.f32 %v774, %v1594
        %1596 = vmatmul.f32.gmra.mxu0 %v1101
        %v1597 = vpop.f32.mrf.mxu0
        %v1598 = vadd.f32 %v775, %v1597
        %1599 = vmatmul.f32.gmra.mxu0 %v1104
        %v1600 = vpop.f32.mrf.mxu0
        %v1601 = vadd.f32 %v776, %v1600
        %1602 = vmatmul.f32.gmra.mxu0 %v1107
        %v1603 = vpop.f32.mrf.mxu0
        %v1604 = vadd.f32 %v777, %v1603
        %1605 = vmatmul.f32.gmra.mxu0 %v1110
        %v1606 = vpop.f32.mrf.mxu0
        %v1607 = vadd.f32 %v778, %v1606
        %1608 = vmatmul.f32.gmra.mxu0 %v1113
        %v1609 = vpop.f32.mrf.mxu0
        %v1610 = vadd.f32 %v779, %v1609
        %1611 = vmatmul.f32.gmra.mxu0 %v1116
        %v1612 = vpop.f32.mrf.mxu0
        %v1613 = vadd.f32 %v780, %v1612
        %1614 = vmatmul.f32.gmra.mxu0 %v1119
        %v1615 = vpop.f32.mrf.mxu0
        %v1616 = vadd.f32 %v781, %v1615
        %1617 = vmatmul.f32.gmra.mxu0 %v1122
        %v1618 = vpop.f32.mrf.mxu0
        %v1619 = vadd.f32 %v782, %v1618
        %1620 = vmatmul.f32.gmra.mxu0 %v1125
        %v1621 = vpop.f32.mrf.mxu0
        %v1622 = vadd.f32 %v783, %v1621
        %1623 = vmatmul.f32.gmra.mxu0 %v1128
        %v1624 = vpop.f32.mrf.mxu0
        %v1625 = vadd.f32 %v784, %v1624
        %1626 = vmatmul.f32.gmra.mxu0 %v1131
        %v1627 = vpop.f32.mrf.mxu0
        %v1628 = vadd.f32 %v785, %v1627
        %1629 = vmatmul.f32.gmra.mxu0 %v1134
        %v1630 = vpop.f32.mrf.mxu0
        %v1631 = vadd.f32 %v786, %v1630
        %1632 = vmatmul.f32.gmra.mxu0 %v1137
        %v1633 = vpop.f32.mrf.mxu0
        %v1634 = vadd.f32 %v787, %v1633
        %1635 = vmatmul.f32.gmra.mxu0 %v1140
        %v1636 = vpop.f32.mrf.mxu0
        %v1637 = vadd.f32 %v788, %v1636
        %1638 = vmatmul.f32.gmra.mxu0 %v1143
        %v1639 = vpop.f32.mrf.mxu0
        %v1640 = vadd.f32 %v789, %v1639
        %1641 = vmatmul.f32.gmra.mxu0 %v1146
        %v1642 = vpop.f32.mrf.mxu0
        %v1643 = vadd.f32 %v790, %v1642
        %1644 = vmatmul.f32.gmra.mxu0 %v1149
        %v1645 = vpop.f32.mrf.mxu0
        %v1646 = vadd.f32 %v791, %v1645
        %1647 = vmatmul.f32.gmra.mxu0 %v1152
        %v1648 = vpop.f32.mrf.mxu0
        %v1649 = vadd.f32 %v792, %v1648
        %1650 = vmatmul.f32.gmra.mxu0 %v1155
        %v1651 = vpop.f32.mrf.mxu0
        %v1652 = vadd.f32 %v793, %v1651
        %1653 = vmatmul.f32.gmra.mxu0 %v1158
        %v1654 = vpop.f32.mrf.mxu0
        %v1655 = vadd.f32 %v794, %v1654
        %1656 = vmatmul.f32.gmra.mxu0 %v1161
        %v1657 = vpop.f32.mrf.mxu0
        %v1658 = vadd.f32 %v795, %v1657
        %1659 = vmatmul.f32.gmra.mxu0 %v1164
        %v1660 = vpop.f32.mrf.mxu0
        %v1661 = vadd.f32 %v796, %v1660
        %1662 = vmatmul.f32.gmra.mxu0 %v1167
        %v1663 = vpop.f32.mrf.mxu0
        %v1664 = vadd.f32 %v797, %v1663
        %1665 = vmatmul.f32.gmra.mxu0 %v1170
        %v1666 = vpop.f32.mrf.mxu0
        %v1667 = vadd.f32 %v798, %v1666
        %1668 = vmatmul.f32.gmra.mxu0 %v1173
        %v1669 = vpop.f32.mrf.mxu0
        %v1670 = vadd.f32 %v799, %v1669
        %1671 = vmatmul.f32.gmra.mxu0 %v1176
        %v1672 = vpop.f32.mrf.mxu0
        %v1673 = vadd.f32 %v800, %v1672
        %1674 = vmatmul.f32.gmra.mxu0 %v1179
        %v1675 = vpop.f32.mrf.mxu0
        %v1676 = vadd.f32 %v801, %v1675
        %1677 = vmatmul.f32.gmra.mxu0 %v1182
        %v1678 = vpop.f32.mrf.mxu0
        %v1679 = vadd.f32 %v802, %v1678
        %1680 = vmatmul.f32.gmra.mxu0 %v1185
        %v1681 = vpop.f32.mrf.mxu0
        %v1682 = vadd.f32 %v803, %v1681
        %1683 = vmatmul.f32.gmra.mxu0 %v1188
        %v1684 = vpop.f32.mrf.mxu0
        %v1685 = vadd.f32 %v804, %v1684
        %1686 = vmatmul.f32.gmra.mxu0 %v1191
        %v1687 = vpop.f32.mrf.mxu0
        %v1688 = vadd.f32 %v805, %v1687
        %1689 = vmatmul.f32.gmra.mxu0 %v1194
        %v1690 = vpop.f32.mrf.mxu0
        %v1691 = vadd.f32 %v806, %v1690
        %1692 = vmatmul.f32.gmra.mxu0 %v1197
        %v1693 = vpop.f32.mrf.mxu0
        %v1694 = vadd.f32 %v807, %v1693
        %1695 = vmatmul.f32.gmra.mxu0 %v1200
        %v1696 = vpop.f32.mrf.mxu0
        %v1697 = vadd.f32 %v808, %v1696
        %1698 = vmatmul.f32.gmra.mxu0 %v1203
        %v1699 = vpop.f32.mrf.mxu0
        %v1700 = vadd.f32 %v809, %v1699
        %1701 = vmatmul.f32.gmra.mxu0 %v1206
        %v1702 = vpop.f32.mrf.mxu0
        %v1703 = vadd.f32 %v810, %v1702
        %1704 = vmatmul.f32.gmra.mxu0 %v1209
        %v1705 = vpop.f32.mrf.mxu0
        %v1706 = vadd.f32 %v811, %v1705
        %1707 = vmatmul.f32.gmra.mxu0 %v1212
        %v1708 = vpop.f32.mrf.mxu0
        %v1709 = vadd.f32 %v812, %v1708
        %1710 = vmatmul.f32.gmra.mxu0 %v1215
        %v1711 = vpop.f32.mrf.mxu0
        %v1712 = vadd.f32 %v813, %v1711
        %1713 = vmatmul.f32.gmra.mxu0 %v1218
        %v1714 = vpop.f32.mrf.mxu0
        %v1715 = vadd.f32 %v814, %v1714
        %1716 = vmatmul.f32.gmra.mxu0 %v1221
        %v1717 = vpop.f32.mrf.mxu0
        %v1718 = vadd.f32 %v815, %v1717
        %1719 = vmatmul.f32.gmra.mxu0 %v1224
        %v1720 = vpop.f32.mrf.mxu0
        %v1721 = vadd.f32 %v816, %v1720
        %1722 = vmatmul.f32.gmra.mxu0 %v1227
        %v1723 = vpop.f32.mrf.mxu0
        %v1724 = vadd.f32 %v817, %v1723
        %1725 = vmatmul.f32.gmra.mxu0 %v1230
        %v1726 = vpop.f32.mrf.mxu0
        %v1727 = vadd.f32 %v818, %v1726
        %1728 = vmatmul.f32.gmra.mxu0 %v1233
        %v1729 = vpop.f32.mrf.mxu0
        %v1730 = vadd.f32 %v819, %v1729
        %1731 = vmatmul.f32.gmra.mxu0 %v1236
        %v1732 = vpop.f32.mrf.mxu0
        %v1733 = vadd.f32 %v820, %v1732
        %1734 = vmatmul.f32.gmra.mxu0 %v1239
        %v1735 = vpop.f32.mrf.mxu0
        %v1736 = vadd.f32 %v821, %v1735
        %1737 = vmatmul.f32.gmra.mxu0 %v1242
        %v1738 = vpop.f32.mrf.mxu0
        %v1739 = vadd.f32 %v822, %v1738
        %1740 = vmatmul.f32.gmra.mxu0 %v1245
        %v1741 = vpop.f32.mrf.mxu0
        %v1742 = vadd.f32 %v823, %v1741
        %1743 = vmatmul.f32.gmra.mxu0 %v1248
        %v1744 = vpop.f32.mrf.mxu0
        %v1745 = vadd.f32 %v824, %v1744
        %1746 = vmatmul.f32.gmra.mxu0 %v1251
        %v1747 = vpop.f32.mrf.mxu0
        %v1748 = vadd.f32 %v825, %v1747
        %1749 = vmatmul.f32.gmra.mxu0 %v1254
        %v1750 = vpop.f32.mrf.mxu0
        %v1751 = vadd.f32 %v826, %v1750
        %1752 = vmatmul.f32.gmra.mxu0 %v1257
        %v1753 = vpop.f32.mrf.mxu0
        %v1754 = vadd.f32 %v827, %v1753
        %1755 = vmatmul.f32.gmra.mxu0 %v1260
        %v1756 = vpop.f32.mrf.mxu0
        %v1757 = vadd.f32 %v828, %v1756
        %1758 = vmatmul.f32.gmra.mxu0 %v1263
        %v1759 = vpop.f32.mrf.mxu0
        %v1760 = vadd.f32 %v829, %v1759
        %1761 = vmatmul.f32.gmra.mxu0 %v1266
        %v1762 = vpop.f32.mrf.mxu0
        %v1763 = vadd.f32 %v830, %v1762
        %1764 = vmatmul.f32.gmra.mxu0 %v1269
        %v1765 = vpop.f32.mrf.mxu0
        %v1766 = vadd.f32 %v831, %v1765
        %1767 = vmatmul.f32.gmra.mxu0 %v1272
        %v1768 = vpop.f32.mrf.mxu0
        %v1769 = vadd.f32 %v832, %v1768
        %1770 = vmatmul.f32.gmra.mxu0 %v1275
        %v1771 = vpop.f32.mrf.mxu0
        %v1772 = vadd.f32 %v833, %v1771
        %1773 = vmatmul.f32.gmra.mxu0 %v1278
        %v1774 = vpop.f32.mrf.mxu0
        %v1775 = vadd.f32 %v834, %v1774
        %1776 = vmatmul.f32.gmra.mxu0 %v1281
        %v1777 = vpop.f32.mrf.mxu0
        %v1778 = vadd.f32 %v835, %v1777
        %1779 = vmatmul.f32.gmra.mxu0 %v1284
        %v1780 = vpop.f32.mrf.mxu0
        %v1781 = vadd.f32 %v836, %v1780
        %1782 = vmatmul.f32.gmra.mxu0 %v1287
        %v1783 = vpop.f32.mrf.mxu0
        %v1784 = vadd.f32 %v837, %v1783
        %1785 = vmatmul.f32.gmra.mxu0 %v1290
        %v1786 = vpop.f32.mrf.mxu0
        %v1787 = vadd.f32 %v838, %v1786
        %1788 = vmatmul.f32.gmra.mxu0 %v1293
        %v1789 = vpop.f32.mrf.mxu0
        %v1790 = vadd.f32 %v839, %v1789
        %1791 = vmatmul.f32.gmra.mxu0 %v1296
        %v1792 = vpop.f32.mrf.mxu0
        %v1793 = vadd.f32 %v840, %v1792
        %1794 = vmatmul.f32.gmra.mxu0 %v1299
        %v1795 = vpop.f32.mrf.mxu0
        %v1796 = vadd.f32 %v841, %v1795
        %1797 = vmatmul.f32.gmra.mxu0 %v1302
        %v1798 = vpop.f32.mrf.mxu0
        %v1799 = vadd.f32 %v842, %v1798
        %1800 = vmatmul.f32.gmra.mxu0 %v1305
        %v1801 = vpop.f32.mrf.mxu0
        %v1802 = vadd.f32 %v843, %v1801
        %1803 = vmatmul.f32.gmra.mxu0 %v1308
        %v1804 = vpop.f32.mrf.mxu0
        %v1805 = vadd.f32 %v844, %v1804
        %1806 = vmatmul.f32.gmra.mxu0 %v1311
        %v1807 = vpop.f32.mrf.mxu0
        %v1808 = vadd.f32 %v845, %v1807
        %1809 = vmatmul.f32.gmra.mxu0 %v1314
        %v1810 = vpop.f32.mrf.mxu0
        %v1811 = vadd.f32 %v846, %v1810
        %1812 = vmatmul.f32.gmra.mxu0 %v1317
        %v1813 = vpop.f32.mrf.mxu0
        %v1814 = vadd.f32 %v847, %v1813
        %1815 = vmatmul.f32.gmra.mxu0 %v1320
        %v1816 = vpop.f32.mrf.mxu0
        %v1817 = vadd.f32 %v848, %v1816
        %1818 = vmatmul.f32.gmra.mxu0 %v1323
        %v1819 = vpop.f32.mrf.mxu0
        %v1820 = vadd.f32 %v849, %v1819
        %1821 = vmatmul.f32.gmra.mxu0 %v1326
        %v1822 = vpop.f32.mrf.mxu0
        %v1823 = vadd.f32 %v850, %v1822
        %1824 = vmatmul.f32.gmra.mxu0 %v1329
        %v1825 = vpop.f32.mrf.mxu0
        %v1826 = vadd.f32 %v851, %v1825
        %1827 = vmatmul.f32.gmra.mxu0 %v1332
        %v1828 = vpop.f32.mrf.mxu0
        %v1829 = vadd.f32 %v852, %v1828
        %1830 = vdwg.mxu0
        %v1831 = vsub.f32 0.0, %v1352
        %v1832 = vsub.f32 0.0, %v1355
        %v1833 = vsub.f32 0.0, %v1358
        %v1834 = vsub.f32 0.0, %v1361
        %v1835 = vsub.f32 0.0, %v1364
        %v1836 = vsub.f32 0.0, %v1367
        %v1837 = vsub.f32 0.0, %v1370
        %v1838 = vsub.f32 0.0, %v1373
        %v1839 = vsub.f32 0.0, %v1376
        %v1840 = vsub.f32 0.0, %v1379
        %v1841 = vsub.f32 0.0, %v1382
        %v1842 = vsub.f32 0.0, %v1385
        %v1843 = vsub.f32 0.0, %v1388
        %v1844 = vsub.f32 0.0, %v1391
        %v1845 = vsub.f32 0.0, %v1394
        %v1846 = vsub.f32 0.0, %v1397
        %v1847 = vsub.f32 0.0, %v1400
        %v1848 = vsub.f32 0.0, %v1403
        %v1849 = vsub.f32 0.0, %v1406
        %v1850 = vsub.f32 0.0, %v1409
        %v1851 = vsub.f32 0.0, %v1412
        %v1852 = vsub.f32 0.0, %v1415
        %v1853 = vsub.f32 0.0, %v1418
        %v1854 = vsub.f32 0.0, %v1421
        %v1855 = vsub.f32 0.0, %v1424
        %v1856 = vsub.f32 0.0, %v1427
        %v1857 = vsub.f32 0.0, %v1430
        %v1858 = vsub.f32 0.0, %v1433
        %v1859 = vsub.f32 0.0, %v1436
        %v1860 = vsub.f32 0.0, %v1439
        %v1861 = vsub.f32 0.0, %v1442
        %v1862 = vsub.f32 0.0, %v1445
        %v1863 = vsub.f32 0.0, %v1448
        %v1864 = vsub.f32 0.0, %v1451
        %v1865 = vsub.f32 0.0, %v1454
        %v1866 = vsub.f32 0.0, %v1457
        %v1867 = vsub.f32 0.0, %v1460
        %v1868 = vsub.f32 0.0, %v1463
        %v1869 = vsub.f32 0.0, %v1466
        %v1870 = vsub.f32 0.0, %v1469
        %v1871 = vsub.f32 0.0, %v1472
        %v1872 = vsub.f32 0.0, %v1475
        %v1873 = vsub.f32 0.0, %v1478
        %v1874 = vsub.f32 0.0, %v1481
        %v1875 = vsub.f32 0.0, %v1484
        %v1876 = vsub.f32 0.0, %v1487
        %v1877 = vsub.f32 0.0, %v1490
        %v1878 = vsub.f32 0.0, %v1493
        %v1879 = vsub.f32 0.0, %v1496
        %v1880 = vsub.f32 0.0, %v1499
        %v1881 = vsub.f32 0.0, %v1502
        %v1882 = vsub.f32 0.0, %v1505
        %v1883 = vsub.f32 0.0, %v1508
        %v1884 = vsub.f32 0.0, %v1511
        %v1885 = vsub.f32 0.0, %v1514
        %v1886 = vsub.f32 0.0, %v1517
        %v1887 = vsub.f32 0.0, %v1520
        %v1888 = vsub.f32 0.0, %v1523
        %v1889 = vsub.f32 0.0, %v1526
        %v1890 = vsub.f32 0.0, %v1529
        %v1891 = vsub.f32 0.0, %v1532
        %v1892 = vsub.f32 0.0, %v1535
        %v1893 = vsub.f32 0.0, %v1538
        %v1894 = vsub.f32 0.0, %v1541
        %v1895 = vsub.f32 0.0, %v1544
        %v1896 = vsub.f32 0.0, %v1547
        %v1897 = vsub.f32 0.0, %v1550
        %v1898 = vsub.f32 0.0, %v1553
        %v1899 = vsub.f32 0.0, %v1556
        %v1900 = vsub.f32 0.0, %v1559
        %v1901 = vsub.f32 0.0, %v1562
        %v1902 = vsub.f32 0.0, %v1565
        %v1903 = vsub.f32 0.0, %v1568
        %v1904 = vsub.f32 0.0, %v1571
        %v1905 = vsub.f32 0.0, %v1574
        %v1906 = vsub.f32 0.0, %v1577
        %v1907 = vsub.f32 0.0, %v1580
        %v1908 = vsub.f32 0.0, %v1583
        %v1909 = vsub.f32 0.0, %v1586
        %v1910 = vsub.f32 0.0, %v1589
        %v1911 = vsub.f32 0.0, %v1592
        %v1912 = vsub.f32 0.0, %v1595
        %v1913 = vsub.f32 0.0, %v1598
        %v1914 = vsub.f32 0.0, %v1601
        %v1915 = vsub.f32 0.0, %v1604
        %v1916 = vsub.f32 0.0, %v1607
        %v1917 = vsub.f32 0.0, %v1610
        %v1918 = vsub.f32 0.0, %v1613
        %v1919 = vsub.f32 0.0, %v1616
        %v1920 = vsub.f32 0.0, %v1619
        %v1921 = vsub.f32 0.0, %v1622
        %v1922 = vsub.f32 0.0, %v1625
        %v1923 = vsub.f32 0.0, %v1628
        %v1924 = vsub.f32 0.0, %v1631
        %v1925 = vsub.f32 0.0, %v1634
        %v1926 = vsub.f32 0.0, %v1637
        %v1927 = vsub.f32 0.0, %v1640
        %v1928 = vsub.f32 0.0, %v1643
        %v1929 = vsub.f32 0.0, %v1646
        %v1930 = vsub.f32 0.0, %v1649
        %v1931 = vsub.f32 0.0, %v1652
        %v1932 = vsub.f32 0.0, %v1655
        %v1933 = vsub.f32 0.0, %v1658
        %v1934 = vsub.f32 0.0, %v1661
        %v1935 = vsub.f32 0.0, %v1664
        %v1936 = vsub.f32 0.0, %v1667
        %v1937 = vsub.f32 0.0, %v1670
        %v1938 = vsub.f32 0.0, %v1673
        %v1939 = vsub.f32 0.0, %v1676
        %v1940 = vsub.f32 0.0, %v1679
        %v1941 = vsub.f32 0.0, %v1682
        %v1942 = vsub.f32 0.0, %v1685
        %v1943 = vsub.f32 0.0, %v1688
        %v1944 = vsub.f32 0.0, %v1691
        %v1945 = vsub.f32 0.0, %v1694
        %v1946 = vsub.f32 0.0, %v1697
        %v1947 = vsub.f32 0.0, %v1700
        %v1948 = vsub.f32 0.0, %v1703
        %v1949 = vsub.f32 0.0, %v1706
        %v1950 = vsub.f32 0.0, %v1709
        %v1951 = vsub.f32 0.0, %v1712
        %v1952 = vsub.f32 0.0, %v1715
        %v1953 = vsub.f32 0.0, %v1718
        %v1954 = vsub.f32 0.0, %v1721
        %v1955 = vsub.f32 0.0, %v1724
        %v1956 = vsub.f32 0.0, %v1727
        %v1957 = vsub.f32 0.0, %v1730
        %v1958 = vsub.f32 0.0, %v1733
        %v1959 = vsub.f32 0.0, %v1736
        %v1960 = vsub.f32 0.0, %v1739
        %v1961 = vsub.f32 0.0, %v1742
        %v1962 = vsub.f32 0.0, %v1745
        %v1963 = vsub.f32 0.0, %v1748
        %v1964 = vsub.f32 0.0, %v1751
        %v1965 = vsub.f32 0.0, %v1754
        %v1966 = vsub.f32 0.0, %v1757
        %v1967 = vsub.f32 0.0, %v1760
        %v1968 = vsub.f32 0.0, %v1763
        %v1969 = vsub.f32 0.0, %v1766
        %v1970 = vsub.f32 0.0, %v1769
        %v1971 = vsub.f32 0.0, %v1772
        %v1972 = vsub.f32 0.0, %v1775
        %v1973 = vsub.f32 0.0, %v1778
        %v1974 = vsub.f32 0.0, %v1781
        %v1975 = vsub.f32 0.0, %v1784
        %v1976 = vsub.f32 0.0, %v1787
        %v1977 = vsub.f32 0.0, %v1790
        %v1978 = vsub.f32 0.0, %v1793
        %v1979 = vsub.f32 0.0, %v1796
        %v1980 = vsub.f32 0.0, %v1799
        %v1981 = vsub.f32 0.0, %v1802
        %v1982 = vsub.f32 0.0, %v1805
        %v1983 = vsub.f32 0.0, %v1808
        %v1984 = vsub.f32 0.0, %v1811
        %v1985 = vsub.f32 0.0, %v1814
        %v1986 = vsub.f32 0.0, %v1817
        %v1987 = vsub.f32 0.0, %v1820
        %v1988 = vsub.f32 0.0, %v1823
        %v1989 = vsub.f32 0.0, %v1826
        %v1990 = vsub.f32 0.0, %v1829
        %v1991 = vmul.f32 %v1831, 1.442695
        %v1992 = vpow.pop %v1991
        %v1993 = vmul.f32 %v1832, 1.442695
        %v1994 = vpow.pop %v1993
        %v1995 = vmul.f32 %v1833, 1.442695
        %v1996 = vpow.pop %v1995
        %v1997 = vmul.f32 %v1834, 1.442695
        %v1998 = vpow.pop %v1997
        %v1999 = vmul.f32 %v1835, 1.442695
        %v2000 = vpow.pop %v1999
        %v2001 = vmul.f32 %v1836, 1.442695
        %v2002 = vpow.pop %v2001
        %v2003 = vmul.f32 %v1837, 1.442695
        %v2004 = vpow.pop %v2003
        %v2005 = vmul.f32 %v1838, 1.442695
        %v2006 = vpow.pop %v2005
        %v2007 = vmul.f32 %v1839, 1.442695
        %v2008 = vpow.pop %v2007
        %v2009 = vmul.f32 %v1840, 1.442695
        %v2010 = vpow.pop %v2009
        %v2011 = vmul.f32 %v1841, 1.442695
        %v2012 = vpow.pop %v2011
        %v2013 = vmul.f32 %v1842, 1.442695
        %v2014 = vpow.pop %v2013
        %v2015 = vmul.f32 %v1843, 1.442695
        %v2016 = vpow.pop %v2015
        %v2017 = vmul.f32 %v1844, 1.442695
        %v2018 = vpow.pop %v2017
        %v2019 = vmul.f32 %v1845, 1.442695
        %v2020 = vpow.pop %v2019
        %v2021 = vmul.f32 %v1846, 1.442695
        %v2022 = vpow.pop %v2021
        %v2023 = vmul.f32 %v1847, 1.442695
        %v2024 = vpow.pop %v2023
        %v2025 = vmul.f32 %v1848, 1.442695
        %v2026 = vpow.pop %v2025
        %v2027 = vmul.f32 %v1849, 1.442695
        %v2028 = vpow.pop %v2027
        %v2029 = vmul.f32 %v1850, 1.442695
        %v2030 = vpow.pop %v2029
        %v2031 = vmul.f32 %v1851, 1.442695
        %v2032 = vpow.pop %v2031
        %v2033 = vmul.f32 %v1852, 1.442695
        %v2034 = vpow.pop %v2033
        %v2035 = vmul.f32 %v1853, 1.442695
        %v2036 = vpow.pop %v2035
        %v2037 = vmul.f32 %v1854, 1.442695
        %v2038 = vpow.pop %v2037
        %v2039 = vmul.f32 %v1855, 1.442695
        %v2040 = vpow.pop %v2039
        %v2041 = vmul.f32 %v1856, 1.442695
        %v2042 = vpow.pop %v2041
        %v2043 = vmul.f32 %v1857, 1.442695
        %v2044 = vpow.pop %v2043
        %v2045 = vmul.f32 %v1858, 1.442695
        %v2046 = vpow.pop %v2045
        %v2047 = vmul.f32 %v1859, 1.442695
        %v2048 = vpow.pop %v2047
        %v2049 = vmul.f32 %v1860, 1.442695
        %v2050 = vpow.pop %v2049
        %v2051 = vmul.f32 %v1861, 1.442695
        %v2052 = vpow.pop %v2051
        %v2053 = vmul.f32 %v1862, 1.442695
        %v2054 = vpow.pop %v2053
        %v2055 = vmul.f32 %v1863, 1.442695
        %v2056 = vpow.pop %v2055
        %v2057 = vmul.f32 %v1864, 1.442695
        %v2058 = vpow.pop %v2057
        %v2059 = vmul.f32 %v1865, 1.442695
        %v2060 = vpow.pop %v2059
        %v2061 = vmul.f32 %v1866, 1.442695
        %v2062 = vpow.pop %v2061
        %v2063 = vmul.f32 %v1867, 1.442695
        %v2064 = vpow.pop %v2063
        %v2065 = vmul.f32 %v1868, 1.442695
        %v2066 = vpow.pop %v2065
        %v2067 = vmul.f32 %v1869, 1.442695
        %v2068 = vpow.pop %v2067
        %v2069 = vmul.f32 %v1870, 1.442695
        %v2070 = vpow.pop %v2069
        %v2071 = vmul.f32 %v1871, 1.442695
        %v2072 = vpow.pop %v2071
        %v2073 = vmul.f32 %v1872, 1.442695
        %v2074 = vpow.pop %v2073
        %v2075 = vmul.f32 %v1873, 1.442695
        %v2076 = vpow.pop %v2075
        %v2077 = vmul.f32 %v1874, 1.442695
        %v2078 = vpow.pop %v2077
        %v2079 = vmul.f32 %v1875, 1.442695
        %v2080 = vpow.pop %v2079
        %v2081 = vmul.f32 %v1876, 1.442695
        %v2082 = vpow.pop %v2081
        %v2083 = vmul.f32 %v1877, 1.442695
        %v2084 = vpow.pop %v2083
        %v2085 = vmul.f32 %v1878, 1.442695
        %v2086 = vpow.pop %v2085
        %v2087 = vmul.f32 %v1879, 1.442695
        %v2088 = vpow.pop %v2087
        %v2089 = vmul.f32 %v1880, 1.442695
        %v2090 = vpow.pop %v2089
        %v2091 = vmul.f32 %v1881, 1.442695
        %v2092 = vpow.pop %v2091
        %v2093 = vmul.f32 %v1882, 1.442695
        %v2094 = vpow.pop %v2093
        %v2095 = vmul.f32 %v1883, 1.442695
        %v2096 = vpow.pop %v2095
        %v2097 = vmul.f32 %v1884, 1.442695
        %v2098 = vpow.pop %v2097
        %v2099 = vmul.f32 %v1885, 1.442695
        %v2100 = vpow.pop %v2099
        %v2101 = vmul.f32 %v1886, 1.442695
        %v2102 = vpow.pop %v2101
        %v2103 = vmul.f32 %v1887, 1.442695
        %v2104 = vpow.pop %v2103
        %v2105 = vmul.f32 %v1888, 1.442695
        %v2106 = vpow.pop %v2105
        %v2107 = vmul.f32 %v1889, 1.442695
        %v2108 = vpow.pop %v2107
        %v2109 = vmul.f32 %v1890, 1.442695
        %v2110 = vpow.pop %v2109
        %v2111 = vmul.f32 %v1891, 1.442695
        %v2112 = vpow.pop %v2111
        %v2113 = vmul.f32 %v1892, 1.442695
        %v2114 = vpow.pop %v2113
        %v2115 = vmul.f32 %v1893, 1.442695
        %v2116 = vpow.pop %v2115
        %v2117 = vmul.f32 %v1894, 1.442695
        %v2118 = vpow.pop %v2117
        %v2119 = vmul.f32 %v1895, 1.442695
        %v2120 = vpow.pop %v2119
        %v2121 = vmul.f32 %v1896, 1.442695
        %v2122 = vpow.pop %v2121
        %v2123 = vmul.f32 %v1897, 1.442695
        %v2124 = vpow.pop %v2123
        %v2125 = vmul.f32 %v1898, 1.442695
        %v2126 = vpow.pop %v2125
        %v2127 = vmul.f32 %v1899, 1.442695
        %v2128 = vpow.pop %v2127
        %v2129 = vmul.f32 %v1900, 1.442695
        %v2130 = vpow.pop %v2129
        %v2131 = vmul.f32 %v1901, 1.442695
        %v2132 = vpow.pop %v2131
        %v2133 = vmul.f32 %v1902, 1.442695
        %v2134 = vpow.pop %v2133
        %v2135 = vmul.f32 %v1903, 1.442695
        %v2136 = vpow.pop %v2135
        %v2137 = vmul.f32 %v1904, 1.442695
        %v2138 = vpow.pop %v2137
        %v2139 = vmul.f32 %v1905, 1.442695
        %v2140 = vpow.pop %v2139
        %v2141 = vmul.f32 %v1906, 1.442695
        %v2142 = vpow.pop %v2141
        %v2143 = vmul.f32 %v1907, 1.442695
        %v2144 = vpow.pop %v2143
        %v2145 = vmul.f32 %v1908, 1.442695
        %v2146 = vpow.pop %v2145
        %v2147 = vmul.f32 %v1909, 1.442695
        %v2148 = vpow.pop %v2147
        %v2149 = vmul.f32 %v1910, 1.442695
        %v2150 = vpow.pop %v2149
        %v2151 = vmul.f32 %v1911, 1.442695
        %v2152 = vpow.pop %v2151
        %v2153 = vmul.f32 %v1912, 1.442695
        %v2154 = vpow.pop %v2153
        %v2155 = vmul.f32 %v1913, 1.442695
        %v2156 = vpow.pop %v2155
        %v2157 = vmul.f32 %v1914, 1.442695
        %v2158 = vpow.pop %v2157
        %v2159 = vmul.f32 %v1915, 1.442695
        %v2160 = vpow.pop %v2159
        %v2161 = vmul.f32 %v1916, 1.442695
        %v2162 = vpow.pop %v2161
        %v2163 = vmul.f32 %v1917, 1.442695
        %v2164 = vpow.pop %v2163
        %v2165 = vmul.f32 %v1918, 1.442695
        %v2166 = vpow.pop %v2165
        %v2167 = vmul.f32 %v1919, 1.442695
        %v2168 = vpow.pop %v2167
        %v2169 = vmul.f32 %v1920, 1.442695
        %v2170 = vpow.pop %v2169
        %v2171 = vmul.f32 %v1921, 1.442695
        %v2172 = vpow.pop %v2171
        %v2173 = vmul.f32 %v1922, 1.442695
        %v2174 = vpow.pop %v2173
        %v2175 = vmul.f32 %v1923, 1.442695
        %v2176 = vpow.pop %v2175
        %v2177 = vmul.f32 %v1924, 1.442695
        %v2178 = vpow.pop %v2177
        %v2179 = vmul.f32 %v1925, 1.442695
        %v2180 = vpow.pop %v2179
        %v2181 = vmul.f32 %v1926, 1.442695
        %v2182 = vpow.pop %v2181
        %v2183 = vmul.f32 %v1927, 1.442695
        %v2184 = vpow.pop %v2183
        %v2185 = vmul.f32 %v1928, 1.442695
        %v2186 = vpow.pop %v2185
        %v2187 = vmul.f32 %v1929, 1.442695
        %v2188 = vpow.pop %v2187
        %v2189 = vmul.f32 %v1930, 1.442695
        %v2190 = vpow.pop %v2189
        %v2191 = vmul.f32 %v1931, 1.442695
        %v2192 = vpow.pop %v2191
        %v2193 = vmul.f32 %v1932, 1.442695
        %v2194 = vpow.pop %v2193
        %v2195 = vmul.f32 %v1933, 1.442695
        %v2196 = vpow.pop %v2195
        %v2197 = vmul.f32 %v1934, 1.442695
        %v2198 = vpow.pop %v2197
        %v2199 = vmul.f32 %v1935, 1.442695
        %v2200 = vpow.pop %v2199
        %v2201 = vmul.f32 %v1936, 1.442695
        %v2202 = vpow.pop %v2201
        %v2203 = vmul.f32 %v1937, 1.442695
        %v2204 = vpow.pop %v2203
        %v2205 = vmul.f32 %v1938, 1.442695
        %v2206 = vpow.pop %v2205
        %v2207 = vmul.f32 %v1939, 1.442695
        %v2208 = vpow.pop %v2207
        %v2209 = vmul.f32 %v1940, 1.442695
        %v2210 = vpow.pop %v2209
        %v2211 = vmul.f32 %v1941, 1.442695
        %v2212 = vpow.pop %v2211
        %v2213 = vmul.f32 %v1942, 1.442695
        %v2214 = vpow.pop %v2213
        %v2215 = vmul.f32 %v1943, 1.442695
        %v2216 = vpow.pop %v2215
        %v2217 = vmul.f32 %v1944, 1.442695
        %v2218 = vpow.pop %v2217
        %v2219 = vmul.f32 %v1945, 1.442695
        %v2220 = vpow.pop %v2219
        %v2221 = vmul.f32 %v1946, 1.442695
        %v2222 = vpow.pop %v2221
        %v2223 = vmul.f32 %v1947, 1.442695
        %v2224 = vpow.pop %v2223
        %v2225 = vmul.f32 %v1948, 1.442695
        %v2226 = vpow.pop %v2225
        %v2227 = vmul.f32 %v1949, 1.442695
        %v2228 = vpow.pop %v2227
        %v2229 = vmul.f32 %v1950, 1.442695
        %v2230 = vpow.pop %v2229
        %v2231 = vmul.f32 %v1951, 1.442695
        %v2232 = vpow.pop %v2231
        %v2233 = vmul.f32 %v1952, 1.442695
        %v2234 = vpow.pop %v2233
        %v2235 = vmul.f32 %v1953, 1.442695
        %v2236 = vpow.pop %v2235
        %v2237 = vmul.f32 %v1954, 1.442695
        %v2238 = vpow.pop %v2237
        %v2239 = vmul.f32 %v1955, 1.442695
        %v2240 = vpow.pop %v2239
        %v2241 = vmul.f32 %v1956, 1.442695
        %v2242 = vpow.pop %v2241
        %v2243 = vmul.f32 %v1957, 1.442695
        %v2244 = vpow.pop %v2243
        %v2245 = vmul.f32 %v1958, 1.442695
        %v2246 = vpow.pop %v2245
        %v2247 = vmul.f32 %v1959, 1.442695
        %v2248 = vpow.pop %v2247
        %v2249 = vmul.f32 %v1960, 1.442695
        %v2250 = vpow.pop %v2249
        %v2251 = vmul.f32 %v1961, 1.442695
        %v2252 = vpow.pop %v2251
        %v2253 = vmul.f32 %v1962, 1.442695
        %v2254 = vpow.pop %v2253
        %v2255 = vmul.f32 %v1963, 1.442695
        %v2256 = vpow.pop %v2255
        %v2257 = vmul.f32 %v1964, 1.442695
        %v2258 = vpow.pop %v2257
        %v2259 = vmul.f32 %v1965, 1.442695
        %v2260 = vpow.pop %v2259
        %v2261 = vmul.f32 %v1966, 1.442695
        %v2262 = vpow.pop %v2261
        %v2263 = vmul.f32 %v1967, 1.442695
        %v2264 = vpow.pop %v2263
        %v2265 = vmul.f32 %v1968, 1.442695
        %v2266 = vpow.pop %v2265
        %v2267 = vmul.f32 %v1969, 1.442695
        %v2268 = vpow.pop %v2267
        %v2269 = vmul.f32 %v1970, 1.442695
        %v2270 = vpow.pop %v2269
        %v2271 = vmul.f32 %v1971, 1.442695
        %v2272 = vpow.pop %v2271
        %v2273 = vmul.f32 %v1972, 1.442695
        %v2274 = vpow.pop %v2273
        %v2275 = vmul.f32 %v1973, 1.442695
        %v2276 = vpow.pop %v2275
        %v2277 = vmul.f32 %v1974, 1.442695
        %v2278 = vpow.pop %v2277
        %v2279 = vmul.f32 %v1975, 1.442695
        %v2280 = vpow.pop %v2279
        %v2281 = vmul.f32 %v1976, 1.442695
        %v2282 = vpow.pop %v2281
        %v2283 = vmul.f32 %v1977, 1.442695
        %v2284 = vpow.pop %v2283
        %v2285 = vmul.f32 %v1978, 1.442695
        %v2286 = vpow.pop %v2285
        %v2287 = vmul.f32 %v1979, 1.442695
        %v2288 = vpow.pop %v2287
        %v2289 = vmul.f32 %v1980, 1.442695
        %v2290 = vpow.pop %v2289
        %v2291 = vmul.f32 %v1981, 1.442695
        %v2292 = vpow.pop %v2291
        %v2293 = vmul.f32 %v1982, 1.442695
        %v2294 = vpow.pop %v2293
        %v2295 = vmul.f32 %v1983, 1.442695
        %v2296 = vpow.pop %v2295
        %v2297 = vmul.f32 %v1984, 1.442695
        %v2298 = vpow.pop %v2297
        %v2299 = vmul.f32 %v1985, 1.442695
        %v2300 = vpow.pop %v2299
        %v2301 = vmul.f32 %v1986, 1.442695
        %v2302 = vpow.pop %v2301
        %v2303 = vmul.f32 %v1987, 1.442695
        %v2304 = vpow.pop %v2303
        %v2305 = vmul.f32 %v1988, 1.442695
        %v2306 = vpow.pop %v2305
        %v2307 = vmul.f32 %v1989, 1.442695
        %v2308 = vpow.pop %v2307
        %v2309 = vmul.f32 %v1990, 1.442695
        %v2310 = vpow.pop %v2309
        %v2311 = vadd.f32 %v1992, 1.0
        %v2312 = vadd.f32 %v1994, 1.0
        %v2313 = vadd.f32 %v1996, 1.0
        %v2314 = vadd.f32 %v1998, 1.0
        %v2315 = vadd.f32 %v2000, 1.0
        %v2316 = vadd.f32 %v2002, 1.0
        %v2317 = vadd.f32 %v2004, 1.0
        %v2318 = vadd.f32 %v2006, 1.0
        %v2319 = vadd.f32 %v2008, 1.0
        %v2320 = vadd.f32 %v2010, 1.0
        %v2321 = vadd.f32 %v2012, 1.0
        %v2322 = vadd.f32 %v2014, 1.0
        %v2323 = vadd.f32 %v2016, 1.0
        %v2324 = vadd.f32 %v2018, 1.0
        %v2325 = vadd.f32 %v2020, 1.0
        %v2326 = vadd.f32 %v2022, 1.0
        %v2327 = vadd.f32 %v2024, 1.0
        %v2328 = vadd.f32 %v2026, 1.0
        %v2329 = vadd.f32 %v2028, 1.0
        %v2330 = vadd.f32 %v2030, 1.0
        %v2331 = vadd.f32 %v2032, 1.0
        %v2332 = vadd.f32 %v2034, 1.0
        %v2333 = vadd.f32 %v2036, 1.0
        %v2334 = vadd.f32 %v2038, 1.0
        %v2335 = vadd.f32 %v2040, 1.0
        %v2336 = vadd.f32 %v2042, 1.0
        %v2337 = vadd.f32 %v2044, 1.0
        %v2338 = vadd.f32 %v2046, 1.0
        %v2339 = vadd.f32 %v2048, 1.0
        %v2340 = vadd.f32 %v2050, 1.0
        %v2341 = vadd.f32 %v2052, 1.0
        %v2342 = vadd.f32 %v2054, 1.0
        %v2343 = vadd.f32 %v2056, 1.0
        %v2344 = vadd.f32 %v2058, 1.0
        %v2345 = vadd.f32 %v2060, 1.0
        %v2346 = vadd.f32 %v2062, 1.0
        %v2347 = vadd.f32 %v2064, 1.0
        %v2348 = vadd.f32 %v2066, 1.0
        %v2349 = vadd.f32 %v2068, 1.0
        %v2350 = vadd.f32 %v2070, 1.0
        %v2351 = vadd.f32 %v2072, 1.0
        %v2352 = vadd.f32 %v2074, 1.0
        %v2353 = vadd.f32 %v2076, 1.0
        %v2354 = vadd.f32 %v2078, 1.0
        %v2355 = vadd.f32 %v2080, 1.0
        %v2356 = vadd.f32 %v2082, 1.0
        %v2357 = vadd.f32 %v2084, 1.0
        %v2358 = vadd.f32 %v2086, 1.0
        %v2359 = vadd.f32 %v2088, 1.0
        %v2360 = vadd.f32 %v2090, 1.0
        %v2361 = vadd.f32 %v2092, 1.0
        %v2362 = vadd.f32 %v2094, 1.0
        %v2363 = vadd.f32 %v2096, 1.0
        %v2364 = vadd.f32 %v2098, 1.0
        %v2365 = vadd.f32 %v2100, 1.0
        %v2366 = vadd.f32 %v2102, 1.0
        %v2367 = vadd.f32 %v2104, 1.0
        %v2368 = vadd.f32 %v2106, 1.0
        %v2369 = vadd.f32 %v2108, 1.0
        %v2370 = vadd.f32 %v2110, 1.0
        %v2371 = vadd.f32 %v2112, 1.0
        %v2372 = vadd.f32 %v2114, 1.0
        %v2373 = vadd.f32 %v2116, 1.0
        %v2374 = vadd.f32 %v2118, 1.0
        %v2375 = vadd.f32 %v2120, 1.0
        %v2376 = vadd.f32 %v2122, 1.0
        %v2377 = vadd.f32 %v2124, 1.0
        %v2378 = vadd.f32 %v2126, 1.0
        %v2379 = vadd.f32 %v2128, 1.0
        %v2380 = vadd.f32 %v2130, 1.0
        %v2381 = vadd.f32 %v2132, 1.0
        %v2382 = vadd.f32 %v2134, 1.0
        %v2383 = vadd.f32 %v2136, 1.0
        %v2384 = vadd.f32 %v2138, 1.0
        %v2385 = vadd.f32 %v2140, 1.0
        %v2386 = vadd.f32 %v2142, 1.0
        %v2387 = vadd.f32 %v2144, 1.0
        %v2388 = vadd.f32 %v2146, 1.0
        %v2389 = vadd.f32 %v2148, 1.0
        %v2390 = vadd.f32 %v2150, 1.0
        %v2391 = vadd.f32 %v2152, 1.0
        %v2392 = vadd.f32 %v2154, 1.0
        %v2393 = vadd.f32 %v2156, 1.0
        %v2394 = vadd.f32 %v2158, 1.0
        %v2395 = vadd.f32 %v2160, 1.0
        %v2396 = vadd.f32 %v2162, 1.0
        %v2397 = vadd.f32 %v2164, 1.0
        %v2398 = vadd.f32 %v2166, 1.0
        %v2399 = vadd.f32 %v2168, 1.0
        %v2400 = vadd.f32 %v2170, 1.0
        %v2401 = vadd.f32 %v2172, 1.0
        %v2402 = vadd.f32 %v2174, 1.0
        %v2403 = vadd.f32 %v2176, 1.0
        %v2404 = vadd.f32 %v2178, 1.0
        %v2405 = vadd.f32 %v2180, 1.0
        %v2406 = vadd.f32 %v2182, 1.0
        %v2407 = vadd.f32 %v2184, 1.0
        %v2408 = vadd.f32 %v2186, 1.0
        %v2409 = vadd.f32 %v2188, 1.0
        %v2410 = vadd.f32 %v2190, 1.0
        %v2411 = vadd.f32 %v2192, 1.0
        %v2412 = vadd.f32 %v2194, 1.0
        %v2413 = vadd.f32 %v2196, 1.0
        %v2414 = vadd.f32 %v2198, 1.0
        %v2415 = vadd.f32 %v2200, 1.0
        %v2416 = vadd.f32 %v2202, 1.0
        %v2417 = vadd.f32 %v2204, 1.0
        %v2418 = vadd.f32 %v2206, 1.0
        %v2419 = vadd.f32 %v2208, 1.0
        %v2420 = vadd.f32 %v2210, 1.0
        %v2421 = vadd.f32 %v2212, 1.0
        %v2422 = vadd.f32 %v2214, 1.0
        %v2423 = vadd.f32 %v2216, 1.0
        %v2424 = vadd.f32 %v2218, 1.0
        %v2425 = vadd.f32 %v2220, 1.0
        %v2426 = vadd.f32 %v2222, 1.0
        %v2427 = vadd.f32 %v2224, 1.0
        %v2428 = vadd.f32 %v2226, 1.0
        %v2429 = vadd.f32 %v2228, 1.0
        %v2430 = vadd.f32 %v2230, 1.0
        %v2431 = vadd.f32 %v2232, 1.0
        %v2432 = vadd.f32 %v2234, 1.0
        %v2433 = vadd.f32 %v2236, 1.0
        %v2434 = vadd.f32 %v2238, 1.0
        %v2435 = vadd.f32 %v2240, 1.0
        %v2436 = vadd.f32 %v2242, 1.0
        %v2437 = vadd.f32 %v2244, 1.0
        %v2438 = vadd.f32 %v2246, 1.0
        %v2439 = vadd.f32 %v2248, 1.0
        %v2440 = vadd.f32 %v2250, 1.0
        %v2441 = vadd.f32 %v2252, 1.0
        %v2442 = vadd.f32 %v2254, 1.0
        %v2443 = vadd.f32 %v2256, 1.0
        %v2444 = vadd.f32 %v2258, 1.0
        %v2445 = vadd.f32 %v2260, 1.0
        %v2446 = vadd.f32 %v2262, 1.0
        %v2447 = vadd.f32 %v2264, 1.0
        %v2448 = vadd.f32 %v2266, 1.0
        %v2449 = vadd.f32 %v2268, 1.0
        %v2450 = vadd.f32 %v2270, 1.0
        %v2451 = vadd.f32 %v2272, 1.0
        %v2452 = vadd.f32 %v2274, 1.0
        %v2453 = vadd.f32 %v2276, 1.0
        %v2454 = vadd.f32 %v2278, 1.0
        %v2455 = vadd.f32 %v2280, 1.0
        %v2456 = vadd.f32 %v2282, 1.0
        %v2457 = vadd.f32 %v2284, 1.0
        %v2458 = vadd.f32 %v2286, 1.0
        %v2459 = vadd.f32 %v2288, 1.0
        %v2460 = vadd.f32 %v2290, 1.0
        %v2461 = vadd.f32 %v2292, 1.0
        %v2462 = vadd.f32 %v2294, 1.0
        %v2463 = vadd.f32 %v2296, 1.0
        %v2464 = vadd.f32 %v2298, 1.0
        %v2465 = vadd.f32 %v2300, 1.0
        %v2466 = vadd.f32 %v2302, 1.0
        %v2467 = vadd.f32 %v2304, 1.0
        %v2468 = vadd.f32 %v2306, 1.0
        %v2469 = vadd.f32 %v2308, 1.0
        %v2470 = vadd.f32 %v2310, 1.0
        %v2471 = vrcp.pop %v2311
        %v2472 = vrcp.pop %v2312
        %v2473 = vrcp.pop %v2313
        %v2474 = vrcp.pop %v2314
        %v2475 = vrcp.pop %v2315
        %v2476 = vrcp.pop %v2316
        %v2477 = vrcp.pop %v2317
        %v2478 = vrcp.pop %v2318
        %v2479 = vrcp.pop %v2319
        %v2480 = vrcp.pop %v2320
        %v2481 = vrcp.pop %v2321
        %v2482 = vrcp.pop %v2322
        %v2483 = vrcp.pop %v2323
        %v2484 = vrcp.pop %v2324
        %v2485 = vrcp.pop %v2325
        %v2486 = vrcp.pop %v2326
        %v2487 = vrcp.pop %v2327
        %v2488 = vrcp.pop %v2328
        %v2489 = vrcp.pop %v2329
        %v2490 = vrcp.pop %v2330
        %v2491 = vrcp.pop %v2331
        %v2492 = vrcp.pop %v2332
        %v2493 = vrcp.pop %v2333
        %v2494 = vrcp.pop %v2334
        %v2495 = vrcp.pop %v2335
        %v2496 = vrcp.pop %v2336
        %v2497 = vrcp.pop %v2337
        %v2498 = vrcp.pop %v2338
        %v2499 = vrcp.pop %v2339
        %v2500 = vrcp.pop %v2340
        %v2501 = vrcp.pop %v2341
        %v2502 = vrcp.pop %v2342
        %v2503 = vrcp.pop %v2343
        %v2504 = vrcp.pop %v2344
        %v2505 = vrcp.pop %v2345
        %v2506 = vrcp.pop %v2346
        %v2507 = vrcp.pop %v2347
        %v2508 = vrcp.pop %v2348
        %v2509 = vrcp.pop %v2349
        %v2510 = vrcp.pop %v2350
        %v2511 = vrcp.pop %v2351
        %v2512 = vrcp.pop %v2352
        %v2513 = vrcp.pop %v2353
        %v2514 = vrcp.pop %v2354
        %v2515 = vrcp.pop %v2355
        %v2516 = vrcp.pop %v2356
        %v2517 = vrcp.pop %v2357
        %v2518 = vrcp.pop %v2358
        %v2519 = vrcp.pop %v2359
        %v2520 = vrcp.pop %v2360
        %v2521 = vrcp.pop %v2361
        %v2522 = vrcp.pop %v2362
        %v2523 = vrcp.pop %v2363
        %v2524 = vrcp.pop %v2364
        %v2525 = vrcp.pop %v2365
        %v2526 = vrcp.pop %v2366
        %v2527 = vrcp.pop %v2367
        %v2528 = vrcp.pop %v2368
        %v2529 = vrcp.pop %v2369
        %v2530 = vrcp.pop %v2370
        %v2531 = vrcp.pop %v2371
        %v2532 = vrcp.pop %v2372
        %v2533 = vrcp.pop %v2373
        %v2534 = vrcp.pop %v2374
        %v2535 = vrcp.pop %v2375
        %v2536 = vrcp.pop %v2376
        %v2537 = vrcp.pop %v2377
        %v2538 = vrcp.pop %v2378
        %v2539 = vrcp.pop %v2379
        %v2540 = vrcp.pop %v2380
        %v2541 = vrcp.pop %v2381
        %v2542 = vrcp.pop %v2382
        %v2543 = vrcp.pop %v2383
        %v2544 = vrcp.pop %v2384
        %v2545 = vrcp.pop %v2385
        %v2546 = vrcp.pop %v2386
        %v2547 = vrcp.pop %v2387
        %v2548 = vrcp.pop %v2388
        %v2549 = vrcp.pop %v2389
        %v2550 = vrcp.pop %v2390
        %v2551 = vrcp.pop %v2391
        %v2552 = vrcp.pop %v2392
        %v2553 = vrcp.pop %v2393
        %v2554 = vrcp.pop %v2394
        %v2555 = vrcp.pop %v2395
        %v2556 = vrcp.pop %v2396
        %v2557 = vrcp.pop %v2397
        %v2558 = vrcp.pop %v2398
        %v2559 = vrcp.pop %v2399
        %v2560 = vrcp.pop %v2400
        %v2561 = vrcp.pop %v2401
        %v2562 = vrcp.pop %v2402
        %v2563 = vrcp.pop %v2403
        %v2564 = vrcp.pop %v2404
        %v2565 = vrcp.pop %v2405
        %v2566 = vrcp.pop %v2406
        %v2567 = vrcp.pop %v2407
        %v2568 = vrcp.pop %v2408
        %v2569 = vrcp.pop %v2409
        %v2570 = vrcp.pop %v2410
        %v2571 = vrcp.pop %v2411
        %v2572 = vrcp.pop %v2412
        %v2573 = vrcp.pop %v2413
        %v2574 = vrcp.pop %v2414
        %v2575 = vrcp.pop %v2415
        %v2576 = vrcp.pop %v2416
        %v2577 = vrcp.pop %v2417
        %v2578 = vrcp.pop %v2418
        %v2579 = vrcp.pop %v2419
        %v2580 = vrcp.pop %v2420
        %v2581 = vrcp.pop %v2421
        %v2582 = vrcp.pop %v2422
        %v2583 = vrcp.pop %v2423
        %v2584 = vrcp.pop %v2424
        %v2585 = vrcp.pop %v2425
        %v2586 = vrcp.pop %v2426
        %v2587 = vrcp.pop %v2427
        %v2588 = vrcp.pop %v2428
        %v2589 = vrcp.pop %v2429
        %v2590 = vrcp.pop %v2430
        %v2591 = vrcp.pop %v2431
        %v2592 = vrcp.pop %v2432
        %v2593 = vrcp.pop %v2433
        %v2594 = vrcp.pop %v2434
        %v2595 = vrcp.pop %v2435
        %v2596 = vrcp.pop %v2436
        %v2597 = vrcp.pop %v2437
        %v2598 = vrcp.pop %v2438
        %v2599 = vrcp.pop %v2439
        %v2600 = vrcp.pop %v2440
        %v2601 = vrcp.pop %v2441
        %v2602 = vrcp.pop %v2442
        %v2603 = vrcp.pop %v2443
        %v2604 = vrcp.pop %v2444
        %v2605 = vrcp.pop %v2445
        %v2606 = vrcp.pop %v2446
        %v2607 = vrcp.pop %v2447
        %v2608 = vrcp.pop %v2448
        %v2609 = vrcp.pop %v2449
        %v2610 = vrcp.pop %v2450
        %v2611 = vrcp.pop %v2451
        %v2612 = vrcp.pop %v2452
        %v2613 = vrcp.pop %v2453
        %v2614 = vrcp.pop %v2454
        %v2615 = vrcp.pop %v2455
        %v2616 = vrcp.pop %v2456
        %v2617 = vrcp.pop %v2457
        %v2618 = vrcp.pop %v2458
        %v2619 = vrcp.pop %v2459
        %v2620 = vrcp.pop %v2460
        %v2621 = vrcp.pop %v2461
        %v2622 = vrcp.pop %v2462
        %v2623 = vrcp.pop %v2463
        %v2624 = vrcp.pop %v2464
        %v2625 = vrcp.pop %v2465
        %v2626 = vrcp.pop %v2466
        %v2627 = vrcp.pop %v2467
        %v2628 = vrcp.pop %v2468
        %v2629 = vrcp.pop %v2469
        %v2630 = vrcp.pop %v2470
        %v2631 = vmul.f32 %v1352, %v2471
        %v2632 = vmul.f32 %v1355, %v2472
        %v2633 = vmul.f32 %v1358, %v2473
        %v2634 = vmul.f32 %v1361, %v2474
        %v2635 = vmul.f32 %v1364, %v2475
        %v2636 = vmul.f32 %v1367, %v2476
        %v2637 = vmul.f32 %v1370, %v2477
        %v2638 = vmul.f32 %v1373, %v2478
        %v2639 = vmul.f32 %v1376, %v2479
        %v2640 = vmul.f32 %v1379, %v2480
        %v2641 = vmul.f32 %v1382, %v2481
        %v2642 = vmul.f32 %v1385, %v2482
        %v2643 = vmul.f32 %v1388, %v2483
        %v2644 = vmul.f32 %v1391, %v2484
        %v2645 = vmul.f32 %v1394, %v2485
        %v2646 = vmul.f32 %v1397, %v2486
        %v2647 = vmul.f32 %v1400, %v2487
        %v2648 = vmul.f32 %v1403, %v2488
        %v2649 = vmul.f32 %v1406, %v2489
        %v2650 = vmul.f32 %v1409, %v2490
        %v2651 = vmul.f32 %v1412, %v2491
        %v2652 = vmul.f32 %v1415, %v2492
        %v2653 = vmul.f32 %v1418, %v2493
        %v2654 = vmul.f32 %v1421, %v2494
        %v2655 = vmul.f32 %v1424, %v2495
        %v2656 = vmul.f32 %v1427, %v2496
        %v2657 = vmul.f32 %v1430, %v2497
        %v2658 = vmul.f32 %v1433, %v2498
        %v2659 = vmul.f32 %v1436, %v2499
        %v2660 = vmul.f32 %v1439, %v2500
        %v2661 = vmul.f32 %v1442, %v2501
        %v2662 = vmul.f32 %v1445, %v2502
        %v2663 = vmul.f32 %v1448, %v2503
        %v2664 = vmul.f32 %v1451, %v2504
        %v2665 = vmul.f32 %v1454, %v2505
        %v2666 = vmul.f32 %v1457, %v2506
        %v2667 = vmul.f32 %v1460, %v2507
        %v2668 = vmul.f32 %v1463, %v2508
        %v2669 = vmul.f32 %v1466, %v2509
        %v2670 = vmul.f32 %v1469, %v2510
        %v2671 = vmul.f32 %v1472, %v2511
        %v2672 = vmul.f32 %v1475, %v2512
        %v2673 = vmul.f32 %v1478, %v2513
        %v2674 = vmul.f32 %v1481, %v2514
        %v2675 = vmul.f32 %v1484, %v2515
        %v2676 = vmul.f32 %v1487, %v2516
        %v2677 = vmul.f32 %v1490, %v2517
        %v2678 = vmul.f32 %v1493, %v2518
        %v2679 = vmul.f32 %v1496, %v2519
        %v2680 = vmul.f32 %v1499, %v2520
        %v2681 = vmul.f32 %v1502, %v2521
        %v2682 = vmul.f32 %v1505, %v2522
        %v2683 = vmul.f32 %v1508, %v2523
        %v2684 = vmul.f32 %v1511, %v2524
        %v2685 = vmul.f32 %v1514, %v2525
        %v2686 = vmul.f32 %v1517, %v2526
        %v2687 = vmul.f32 %v1520, %v2527
        %v2688 = vmul.f32 %v1523, %v2528
        %v2689 = vmul.f32 %v1526, %v2529
        %v2690 = vmul.f32 %v1529, %v2530
        %v2691 = vmul.f32 %v1532, %v2531
        %v2692 = vmul.f32 %v1535, %v2532
        %v2693 = vmul.f32 %v1538, %v2533
        %v2694 = vmul.f32 %v1541, %v2534
        %v2695 = vmul.f32 %v1544, %v2535
        %v2696 = vmul.f32 %v1547, %v2536
        %v2697 = vmul.f32 %v1550, %v2537
        %v2698 = vmul.f32 %v1553, %v2538
        %v2699 = vmul.f32 %v1556, %v2539
        %v2700 = vmul.f32 %v1559, %v2540
        %v2701 = vmul.f32 %v1562, %v2541
        %v2702 = vmul.f32 %v1565, %v2542
        %v2703 = vmul.f32 %v1568, %v2543
        %v2704 = vmul.f32 %v1571, %v2544
        %v2705 = vmul.f32 %v1574, %v2545
        %v2706 = vmul.f32 %v1577, %v2546
        %v2707 = vmul.f32 %v1580, %v2547
        %v2708 = vmul.f32 %v1583, %v2548
        %v2709 = vmul.f32 %v1586, %v2549
        %v2710 = vmul.f32 %v1589, %v2550
        %v2711 = vmul.f32 %v1592, %v2551
        %v2712 = vmul.f32 %v1595, %v2552
        %v2713 = vmul.f32 %v1598, %v2553
        %v2714 = vmul.f32 %v1601, %v2554
        %v2715 = vmul.f32 %v1604, %v2555
        %v2716 = vmul.f32 %v1607, %v2556
        %v2717 = vmul.f32 %v1610, %v2557
        %v2718 = vmul.f32 %v1613, %v2558
        %v2719 = vmul.f32 %v1616, %v2559
        %v2720 = vmul.f32 %v1619, %v2560
        %v2721 = vmul.f32 %v1622, %v2561
        %v2722 = vmul.f32 %v1625, %v2562
        %v2723 = vmul.f32 %v1628, %v2563
        %v2724 = vmul.f32 %v1631, %v2564
        %v2725 = vmul.f32 %v1634, %v2565
        %v2726 = vmul.f32 %v1637, %v2566
        %v2727 = vmul.f32 %v1640, %v2567
        %v2728 = vmul.f32 %v1643, %v2568
        %v2729 = vmul.f32 %v1646, %v2569
        %v2730 = vmul.f32 %v1649, %v2570
        %v2731 = vmul.f32 %v1652, %v2571
        %v2732 = vmul.f32 %v1655, %v2572
        %v2733 = vmul.f32 %v1658, %v2573
        %v2734 = vmul.f32 %v1661, %v2574
        %v2735 = vmul.f32 %v1664, %v2575
        %v2736 = vmul.f32 %v1667, %v2576
        %v2737 = vmul.f32 %v1670, %v2577
        %v2738 = vmul.f32 %v1673, %v2578
        %v2739 = vmul.f32 %v1676, %v2579
        %v2740 = vmul.f32 %v1679, %v2580
        %v2741 = vmul.f32 %v1682, %v2581
        %v2742 = vmul.f32 %v1685, %v2582
        %v2743 = vmul.f32 %v1688, %v2583
        %v2744 = vmul.f32 %v1691, %v2584
        %v2745 = vmul.f32 %v1694, %v2585
        %v2746 = vmul.f32 %v1697, %v2586
        %v2747 = vmul.f32 %v1700, %v2587
        %v2748 = vmul.f32 %v1703, %v2588
        %v2749 = vmul.f32 %v1706, %v2589
        %v2750 = vmul.f32 %v1709, %v2590
        %v2751 = vmul.f32 %v1712, %v2591
        %v2752 = vmul.f32 %v1715, %v2592
        %v2753 = vmul.f32 %v1718, %v2593
        %v2754 = vmul.f32 %v1721, %v2594
        %v2755 = vmul.f32 %v1724, %v2595
        %v2756 = vmul.f32 %v1727, %v2596
        %v2757 = vmul.f32 %v1730, %v2597
        %v2758 = vmul.f32 %v1733, %v2598
        %v2759 = vmul.f32 %v1736, %v2599
        %v2760 = vmul.f32 %v1739, %v2600
        %v2761 = vmul.f32 %v1742, %v2601
        %v2762 = vmul.f32 %v1745, %v2602
        %v2763 = vmul.f32 %v1748, %v2603
        %v2764 = vmul.f32 %v1751, %v2604
        %v2765 = vmul.f32 %v1754, %v2605
        %v2766 = vmul.f32 %v1757, %v2606
        %v2767 = vmul.f32 %v1760, %v2607
        %v2768 = vmul.f32 %v1763, %v2608
        %v2769 = vmul.f32 %v1766, %v2609
        %v2770 = vmul.f32 %v1769, %v2610
        %v2771 = vmul.f32 %v1772, %v2611
        %v2772 = vmul.f32 %v1775, %v2612
        %v2773 = vmul.f32 %v1778, %v2613
        %v2774 = vmul.f32 %v1781, %v2614
        %v2775 = vmul.f32 %v1784, %v2615
        %v2776 = vmul.f32 %v1787, %v2616
        %v2777 = vmul.f32 %v1790, %v2617
        %v2778 = vmul.f32 %v1793, %v2618
        %v2779 = vmul.f32 %v1796, %v2619
        %v2780 = vmul.f32 %v1799, %v2620
        %v2781 = vmul.f32 %v1802, %v2621
        %v2782 = vmul.f32 %v1805, %v2622
        %v2783 = vmul.f32 %v1808, %v2623
        %v2784 = vmul.f32 %v1811, %v2624
        %v2785 = vmul.f32 %v1814, %v2625
        %v2786 = vmul.f32 %v1817, %v2626
        %v2787 = vmul.f32 %v1820, %v2627
        %v2788 = vmul.f32 %v1823, %v2628
        %v2789 = vmul.f32 %v1826, %v2629
        %v2790 = vmul.f32 %v1829, %v2630
        %v2791 = vld [vmem:[%s6] sm:$0x3f]
        %v2792 = vld [vmem:[%s6 + $0x8] sm:$0x3f]
        %v2793 = vld [vmem:[%s6 + $0x10] sm:$0x3f]
        %v2794 = vld [vmem:[%s6 + $0x18] sm:$0x3f]
        %v2795 = vld [vmem:[%s6 + $0x20] sm:$0x3f]
        %v2796 = vld [vmem:[%s6 + $0x28] sm:$0x3f]
        %v2797 = vld [vmem:[%s6 + $0x30] sm:$0x3f]
        %v2798 = vld [vmem:[%s6 + $0x38] sm:$0x3f]
        %v2799 = vld [vmem:[%s6 + $0x40] sm:$0x3f]
        %v2800 = vld [vmem:[%s6 + $0x48] sm:$0x3f]
        %v2801 = vld [vmem:[%s7] sm:$0x3f]
        %2802 = vmatpush.msra.mxu0 %v2646
        %2803 = vmatpush.msra.mxu0 %v2645
        %2804 = vmatpush.msra.mxu0 %v2644
        %2805 = vmatpush.msra.mxu0 %v2643
        %2806 = vmatpush.msra.mxu0 %v2642
        %2807 = vmatpush.msra.mxu0 %v2641
        %2808 = vmatpush.msra.mxu0 %v2640
        %2809 = vmatpush.msra.mxu0 %v2639
        %2810 = vmatpush.msra.mxu0 %v2638
        %2811 = vmatpush.msra.mxu0 %v2637
        %2812 = vmatpush.msra.mxu0 %v2636
        %2813 = vmatpush.msra.mxu0 %v2635
        %2814 = vmatpush.msra.mxu0 %v2634
        %2815 = vmatpush.msra.mxu0 %v2633
        %2816 = vmatpush.msra.mxu0 %v2632
        %2817 = vmatpush.msra.mxu0 %v2631
        %2818 = vmatmul.f32.gmra.mxu0 %v2791
        %v2819 = vpop.f32.mrf.mxu0
        %v2820 = vadd.f32 %v2801, %v2819
        %2821 = vdwg.mxu0
        %2822 = vmatpush.msra.mxu0 %v2662
        %2823 = vmatpush.msra.mxu0 %v2661
        %2824 = vmatpush.msra.mxu0 %v2660
        %2825 = vmatpush.msra.mxu0 %v2659
        %2826 = vmatpush.msra.mxu0 %v2658
        %2827 = vmatpush.msra.mxu0 %v2657
        %2828 = vmatpush.msra.mxu0 %v2656
        %2829 = vmatpush.msra.mxu0 %v2655
        %2830 = vmatpush.msra.mxu0 %v2654
        %2831 = vmatpush.msra.mxu0 %v2653
        %2832 = vmatpush.msra.mxu0 %v2652
        %2833 = vmatpush.msra.mxu0 %v2651
        %2834 = vmatpush.msra.mxu0 %v2650
        %2835 = vmatpush.msra.mxu0 %v2649
        %2836 = vmatpush.msra.mxu0 %v2648
        %2837 = vmatpush.msra.mxu0 %v2647
        %2838 = vmatmul.f32.gmra.mxu0 %v2792
        %v2839 = vpop.f32.mrf.mxu0
        %v2840 = vadd.f32 %v2820, %v2839
        %2841 = vdwg.mxu0
        %2842 = vmatpush.msra.mxu0 %v2678
        %2843 = vmatpush.msra.mxu0 %v2677
        %2844 = vmatpush.msra.mxu0 %v2676
        %2845 = vmatpush.msra.mxu0 %v2675
        %2846 = vmatpush.msra.mxu0 %v2674
        %2847 = vmatpush.msra.mxu0 %v2673
        %2848 = vmatpush.msra.mxu0 %v2672
        %2849 = vmatpush.msra.mxu0 %v2671
        %2850 = vmatpush.msra.mxu0 %v2670
        %2851 = vmatpush.msra.mxu0 %v2669
        %2852 = vmatpush.msra.mxu0 %v2668
        %2853 = vmatpush.msra.mxu0 %v2667
        %2854 = vmatpush.msra.mxu0 %v2666
        %2855 = vmatpush.msra.mxu0 %v2665
        %2856 = vmatpush.msra.mxu0 %v2664
        %2857 = vmatpush.msra.mxu0 %v2663
        %2858 = vmatmul.f32.gmra.mxu0 %v2793
        %v2859 = vpop.f32.mrf.mxu0
        %v2860 = vadd.f32 %v2840, %v2859
        %2861 = vdwg.mxu0
        %2862 = vmatpush.msra.mxu0 %v2694
        %2863 = vmatpush.msra.mxu0 %v2693
        %2864 = vmatpush.msra.mxu0 %v2692
        %2865 = vmatpush.msra.mxu0 %v2691
        %2866 = vmatpush.msra.mxu0 %v2690
        %2867 = vmatpush.msra.mxu0 %v2689
        %2868 = vmatpush.msra.mxu0 %v2688
        %2869 = vmatpush.msra.mxu0 %v2687
        %2870 = vmatpush.msra.mxu0 %v2686
        %2871 = vmatpush.msra.mxu0 %v2685
        %2872 = vmatpush.msra.mxu0 %v2684
        %2873 = vmatpush.msra.mxu0 %v2683
        %2874 = vmatpush.msra.mxu0 %v2682
        %2875 = vmatpush.msra.mxu0 %v2681
        %2876 = vmatpush.msra.mxu0 %v2680
        %2877 = vmatpush.msra.mxu0 %v2679
        %2878 = vmatmul.f32.gmra.mxu0 %v2794
        %v2879 = vpop.f32.mrf.mxu0
        %v2880 = vadd.f32 %v2860, %v2879
        %2881 = vdwg.mxu0
        %2882 = vmatpush.msra.mxu0 %v2710
        %2883 = vmatpush.msra.mxu0 %v2709
        %2884 = vmatpush.msra.mxu0 %v2708
        %2885 = vmatpush.msra.mxu0 %v2707
        %2886 = vmatpush.msra.mxu0 %v2706
        %2887 = vmatpush.msra.mxu0 %v2705
        %2888 = vmatpush.msra.mxu0 %v2704
        %2889 = vmatpush.msra.mxu0 %v2703
        %2890 = vmatpush.msra.mxu0 %v2702
        %2891 = vmatpush.msra.mxu0 %v2701
        %2892 = vmatpush.msra.mxu0 %v2700
        %2893 = vmatpush.msra.mxu0 %v2699
        %2894 = vmatpush.msra.mxu0 %v2698
        %2895 = vmatpush.msra.mxu0 %v2697
        %2896 = vmatpush.msra.mxu0 %v2696
        %2897 = vmatpush.msra.mxu0 %v2695
        %2898 = vmatmul.f32.gmra.mxu0 %v2795
        %v2899 = vpop.f32.mrf.mxu0
        %v2900 = vadd.f32 %v2880, %v2899
        %2901 = vdwg.mxu0
        %2902 = vmatpush.msra.mxu0 %v2726
        %2903 = vmatpush.msra.mxu0 %v2725
        %2904 = vmatpush.msra.mxu0 %v2724
        %2905 = vmatpush.msra.mxu0 %v2723
        %2906 = vmatpush.msra.mxu0 %v2722
        %2907 = vmatpush.msra.mxu0 %v2721
        %2908 = vmatpush.msra.mxu0 %v2720
        %2909 = vmatpush.msra.mxu0 %v2719
        %2910 = vmatpush.msra.mxu0 %v2718
        %2911 = vmatpush.msra.mxu0 %v2717
        %2912 = vmatpush.msra.mxu0 %v2716
        %2913 = vmatpush.msra.mxu0 %v2715
        %2914 = vmatpush.msra.mxu0 %v2714
        %2915 = vmatpush.msra.mxu0 %v2713
        %2916 = vmatpush.msra.mxu0 %v2712
        %2917 = vmatpush.msra.mxu0 %v2711
        %2918 = vmatmul.f32.gmra.mxu0 %v2796
        %v2919 = vpop.f32.mrf.mxu0
        %v2920 = vadd.f32 %v2900, %v2919
        %2921 = vdwg.mxu0
        %2922 = vmatpush.msra.mxu0 %v2742
        %2923 = vmatpush.msra.mxu0 %v2741
        %2924 = vmatpush.msra.mxu0 %v2740
        %2925 = vmatpush.msra.mxu0 %v2739
        %2926 = vmatpush.msra.mxu0 %v2738
        %2927 = vmatpush.msra.mxu0 %v2737
        %2928 = vmatpush.msra.mxu0 %v2736
        %2929 = vmatpush.msra.mxu0 %v2735
        %2930 = vmatpush.msra.mxu0 %v2734
        %2931 = vmatpush.msra.mxu0 %v2733
        %2932 = vmatpush.msra.mxu0 %v2732
        %2933 = vmatpush.msra.mxu0 %v2731
        %2934 = vmatpush.msra.mxu0 %v2730
        %2935 = vmatpush.msra.mxu0 %v2729
        %2936 = vmatpush.msra.mxu0 %v2728
        %2937 = vmatpush.msra.mxu0 %v2727
        %2938 = vmatmul.f32.gmra.mxu0 %v2797
        %v2939 = vpop.f32.mrf.mxu0
        %v2940 = vadd.f32 %v2920, %v2939
        %2941 = vdwg.mxu0
        %2942 = vmatpush.msra.mxu0 %v2758
        %2943 = vmatpush.msra.mxu0 %v2757
        %2944 = vmatpush.msra.mxu0 %v2756
        %2945 = vmatpush.msra.mxu0 %v2755
        %2946 = vmatpush.msra.mxu0 %v2754
        %2947 = vmatpush.msra.mxu0 %v2753
        %2948 = vmatpush.msra.mxu0 %v2752
        %2949 = vmatpush.msra.mxu0 %v2751
        %2950 = vmatpush.msra.mxu0 %v2750
        %2951 = vmatpush.msra.mxu0 %v2749
        %2952 = vmatpush.msra.mxu0 %v2748
        %2953 = vmatpush.msra.mxu0 %v2747
        %2954 = vmatpush.msra.mxu0 %v2746
        %2955 = vmatpush.msra.mxu0 %v2745
        %2956 = vmatpush.msra.mxu0 %v2744
        %2957 = vmatpush.msra.mxu0 %v2743
        %2958 = vmatmul.f32.gmra.mxu0 %v2798
        %v2959 = vpop.f32.mrf.mxu0
        %v2960 = vadd.f32 %v2940, %v2959
        %2961 = vdwg.mxu0
        %2962 = vmatpush.msra.mxu0 %v2774
        %2963 = vmatpush.msra.mxu0 %v2773
        %2964 = vmatpush.msra.mxu0 %v2772
        %2965 = vmatpush.msra.mxu0 %v2771
        %2966 = vmatpush.msra.mxu0 %v2770
        %2967 = vmatpush.msra.mxu0 %v2769
        %2968 = vmatpush.msra.mxu0 %v2768
        %2969 = vmatpush.msra.mxu0 %v2767
        %2970 = vmatpush.msra.mxu0 %v2766
        %2971 = vmatpush.msra.mxu0 %v2765
        %2972 = vmatpush.msra.mxu0 %v2764
        %2973 = vmatpush.msra.mxu0 %v2763
        %2974 = vmatpush.msra.mxu0 %v2762
        %2975 = vmatpush.msra.mxu0 %v2761
        %2976 = vmatpush.msra.mxu0 %v2760
        %2977 = vmatpush.msra.mxu0 %v2759
        %2978 = vmatmul.f32.gmra.mxu0 %v2799
        %v2979 = vpop.f32.mrf.mxu0
        %v2980 = vadd.f32 %v2960, %v2979
        %2981 = vdwg.mxu0
        %2982 = vmatpush.msra.mxu0 %v2790
        %2983 = vmatpush.msra.mxu0 %v2789
        %2984 = vmatpush.msra.mxu0 %v2788
        %2985 = vmatpush.msra.mxu0 %v2787
        %2986 = vmatpush.msra.mxu0 %v2786
        %2987 = vmatpush.msra.mxu0 %v2785
        %2988 = vmatpush.msra.mxu0 %v2784
        %2989 = vmatpush.msra.mxu0 %v2783
        %2990 = vmatpush.msra.mxu0 %v2782
        %2991 = vmatpush.msra.mxu0 %v2781
        %2992 = vmatpush.msra.mxu0 %v2780
        %2993 = vmatpush.msra.mxu0 %v2779
        %2994 = vmatpush.msra.mxu0 %v2778
        %2995 = vmatpush.msra.mxu0 %v2777
        %2996 = vmatpush.msra.mxu0 %v2776
        %2997 = vmatpush.msra.mxu0 %v2775
        %2998 = vmatmul.f32.gmra.mxu0 %v2800
        %v2999 = vpop.f32.mrf.mxu0
        %v3000 = vadd.f32 %v2980, %v2999
        %3001 = vdwg.mxu0
        %vm3002 = vcmask 5120
        %3003 = vst.msk [vmem:[%s326] sm:$0x3f] %vm3002, %v3000
      $region60: #{hms_forward.1} parent=51 // pred_fallthru
        _
      %p3004 = scmp.lt.s32.totalorder %s23, 1
      %s3005 = scalar_select %p3004, %s23, 1
      %s3006 = smul.addr %s3005, 8
      %s3007 = scalar_lea.vmem %s8, %s3006
      // Predicated region
      $region61: #{hms_forward.1} parent=51 // pred_check
        %p3008 = pneg %p224
      $region62: #{hms_forward.1} parent=51 // pred_check_branch
        %3010 = sbr.rel (%p3008) target = $region64
      $region63: #{hms_forward.1} parent=51 // pred_region
        _
      $region64: #{hms_forward.1} parent=51 // pred_fallthru
        _
    $region52: #{hms_forward.1} parent=5 // pred_fallthru
      _
    %p3011 = scmp.le.s32.totalorder 2, %s14
    // Predicated region
    $region65: #{hms_forward.1} parent=5 // pred_check
      %p3012 = pneg %p3011
    $region66: #{hms_forward.1} parent=5 // pred_check_branch
      %3014 = sbr.rel (%p3012) target = $region68
    $region67: #{hms_forward.1} parent=5 // pred_region
      %s3015 = ssub.s32 %s14, 2
      // Predicated region
      $region69: #{hms_forward.1} parent=67 // pred_check
        %p3016 = pneg %p230
      $region70: #{hms_forward.1} parent=67 // pred_check_branch
        %3018 = sbr.rel (%p3016) target = $region72
      $region71: #{hms_forward.1} parent=67 // pred_region
        %p3019 = scmp.lt.s32.totalorder %s25, 1
        %s3020 = scalar_select %p3019, %s25, 1
        %s3021 = smul.addr %s3020, 8
        %s3022 = scalar_lea.vmem %s8, %s3021
      $region72: #{hms_forward.1} parent=67 // pred_fallthru
        _
    $region68: #{hms_forward.1} parent=5 // pred_fallthru
      _
  $region6: #{hms_forward.1} parent=0 // loop_footer
    %s18 = sadd.s32 1, %s14
  $region7: #{hms_forward.1} parent=0 // loop_footer_branch
    %13 = sbr.rel target = $region3
  $region8: #{hms_forward.1} parent=0 // loop_exit
    _

</llo_original>
